<compile_context>
chip_gen: v5e
topology: v5e:2x2
jax: 0.10.0
libtpu: 0.0.40
codegen_flags: <defaults>
</compile_context>

<pallas_src>
import functools

import jax
import jax.numpy as jnp
from jax.experimental import pallas as pl
from jax.experimental.pallas import tpu as pltpu


def _ltb_kernel(x_ref, wl_ref, bl_ref, wqkv_ref, w12_ref, o_ref, *,
                num_layers, c, b, mm_dtype):
    # x_ref / o_ref: (b, c, tn)   channels on sublanes, positions on lanes.
    # wl_ref:   (c, c)      block-input Linear weight   (apply as W @ x)
    # bl_ref:   (c, 1)      block-input Linear bias     (broadcast over lanes)
    # wqkv_ref: (L, 3c, c)  stacked [Wq; Wk; Wv]        (qkv = Wqkv @ x)
    # w12_ref:  (L, c, c)   folded FFN weight W2 @ W1   (ffn = W12 @ x)
    f32 = jnp.float32
    scale = c ** (-0.5)

    wl = wl_ref[...]                              # (c, c)  mm_dtype
    bl = bl_ref[...].astype(f32)                  # (c, 1)

    # ---- x = p + Linear(p): per-batch (c, tn) slabs, no transposes ---------
    x = []                                        # f32 working copies
    xm = []                                       # mm_dtype shadows (MXU ops)
    for i in range(b):
        pi = x_ref[i]                             # (c, tn)
        xi = pi.astype(f32) + bl + jnp.dot(
            pi.astype(mm_dtype), wl.T, preferred_element_type=f32) if False else (
            pi.astype(f32) + bl + jnp.dot(wl, pi.astype(mm_dtype),
                                          preferred_element_type=f32))
        x.append(xi)
        xm.append(xi.astype(mm_dtype))

    for l in range(num_layers):
        wqkv = wqkv_ref[l]                        # (3c, c)  mm_dtype
        w12 = w12_ref[l]                          # (c, c)   mm_dtype

        # Fused QKV (W @ x); q/k/v are sublane slices of the (3c, tn) result.
        q, ke, v = [], [], []
        kmax = None
        for i in range(b):
            qkv = jnp.dot(wqkv, xm[i], preferred_element_type=f32)  # (3c, tn)
            qi = qkv[0 * c:1 * c, :]
            ki = qkv[1 * c:2 * c, :]
            vi = qkv[2 * c:3 * c, :]
            # softmax over channels (sublane reduction); c**-0.5 folded in
            qi = jnp.exp(qi - jnp.max(qi, axis=0, keepdims=True))
            qi = qi * (scale / jnp.sum(qi, axis=0, keepdims=True))
            q.append(qi)
            v.append(vi)
            ke.append(ki)
            kmax = ki if kmax is None else jnp.maximum(kmax, ki)

        # softmax over the batch axis (elementwise across the b slabs);
        # ke is reused in place to keep the live working set minimal.
        ksum = None
        for i in range(b):
            e = jnp.exp(ke[i] - kmax)
            ke[i] = e
            ksum = e if ksum is None else ksum + e
        kinv = 1.0 / ksum
        for i in range(b):
            ke[i] = ke[i] * kinv                  # softmax(k, dim=batch)

        # Gram-form linear attention (contraction depth is only b; stays off
        # the MXU):  attn_i[:, n] = sum_j <q_i[:, n], k_j[:, n]> * v_j[:, n]
        for i in range(b):
            acc = None
            for j in range(b):
                s_ij = jnp.sum(q[i] * ke[j], axis=0, keepdims=True)  # (1, tn)
                t = s_ij * v[j]
                acc = t if acc is None else acc + t
            xi = x[i] + acc                       # attn + x
            xim = xi.astype(mm_dtype)
            # folded FFN: fc2(fc1(x)) = (W2 @ W1) @ x   (no activation/bias)
            xi = xi + jnp.dot(w12, xim, preferred_element_type=f32)
            x[i] = xi
            xm[i] = xi.astype(mm_dtype)

    # ---- store: already lane-dense along positions, direct (c, tn) copies --
    for i in range(b):
        o_ref[i] = x[i].astype(o_ref.dtype)


def _chip_config():
    """(multi_core, vmem_capacity_bytes) with conservative fallbacks."""
    vmem_cap = 128 * 1024 * 1024
    multi_core = False
    try:
        info = pltpu.get_tpu_info()
        vmem_cap = int(getattr(info, "vmem_capacity_bytes", vmem_cap)
                       or vmem_cap)
    except Exception:
        pass
    try:
        nc = getattr(jax.devices()[0], "num_cores", None)
        if nc:
            multi_core = int(nc) > 1
    except Exception:
        pass
    # v7x-class: 64 MiB VMEM per TensorCore and 2 TCs per chip.
    if vmem_cap <= 80 * 1024 * 1024:
        multi_core = True
    return multi_core, vmem_cap


def _pick_tn(N, b, c, *, target_block_bytes, multi_core, bytes_per_elem=4):
    """Position-tile size: a multiple of 128 dividing N (lane-dense, unmasked
    stores), block kept under target_block_bytes.  On multi-TensorCore chips
    prefer an even (>=2) grid-step count so the "parallel" axis splits cleanly
    across cores; on single-TC chips a single step is fine for small N."""
    if N % 128 != 0:
        # TODO(synk): ragged N (not a multiple of 128) falls back to a single
        # block over all positions.
        return N
    cap_elems = max(128, target_block_bytes // max(1, b * c * bytes_per_elem))
    cap = max(128, (cap_elems // 128) * 128)
    divs = [t for t in range(128, N + 1, 128) if N % t == 0]
    best = None
    for t in divs:                                # ascending
        if t > cap:
            break
        if multi_core and (N // t) % 2 != 0:
            continue
        best = t
    if best is None:
        fits = [t for t in divs if t <= cap]
        best = max(fits) if fits else divs[0]
    return best


def prepare_params(params, matmul_dtype=jnp.bfloat16):
    """One-time host-side weight prep (hoisted out of the per-call path):
    stack QKV, fold fc2∘fc1, cast to the MXU-operand dtype.  All weights stay
    in the W @ x ("channels on sublanes") orientation, so no transposes."""
    c = params['linear_w'].shape[0]
    mm = matmul_dtype
    return {
        'wl': params['linear_w'].astype(mm),                          # (c, c)
        'bl': params['linear_b'].reshape(c, 1).astype(jnp.float32),   # (c, 1)
        'wqkv': jnp.concatenate([params['wq'], params['wk'],
                                 params['wv']], axis=1).astype(mm),   # (L,3c,c)
        'w12': jnp.einsum('lij,ljk->lik', params['w2'],
                          params['w1']).astype(mm),                   # (L,c,c)
    }


def linear_transformer_block(x, prep, *, tn=None):
    """x: (b, c, H, W).  prep: output of prepare_params (call once).
    Output dtype follows x (pass bf16 x to halve HBM traffic)."""
    b, c, H, W = x.shape
    N = H * W
    L = prep['wqkv'].shape[0]
    mm = prep['wqkv'].dtype
    assert prep['wl'].shape == (c, c), "c1 != c2 Conv path not implemented"

    # Host side only reshapes; all layout work happens inside the kernel.
    xc = x.reshape(b, c, N)

    multi_core, vmem_cap = _chip_config()
    if vmem_cap <= 80 * 1024 * 1024:              # v7x-class (64 MiB / TC)
        target_block_bytes = 2 << 20
        vmem_soft_cap = 48 * 1024 * 1024
    else:                                          # v5e / v6e (128 MiB)
        target_block_bytes = 4 << 20
        vmem_soft_cap = 96 * 1024 * 1024

    if tn is None:
        tn = _pick_tn(N, b, c, target_block_bytes=target_block_bytes,
                      multi_core=multi_core,
                      bytes_per_elem=x.dtype.itemsize)
    assert N % tn == 0

    # VMEM budget: double-buffered in/out blocks + (double-buffered) weights
    # + f32 intermediate working set of the layer loop, with margin.
    io_block = b * c * tn * x.dtype.itemsize
    weight_bytes = ((prep['wl'].size + prep['wqkv'].size + prep['w12'].size)
                    * jnp.dtype(mm).itemsize + prep['bl'].size * 4)
    interm = 12 * b * c * tn * 4
    vmem_limit = int(min(vmem_soft_cap,
                         max(32 << 20,
                             4 * io_block + 2 * weight_bytes + interm
                             + (2 << 20))))

    kernel = functools.partial(_ltb_kernel, num_layers=L, c=c, b=b,
                               mm_dtype=mm)

    # Note: for very large configs (c>=256, L>=4) on v7x, the constant weight
    # BlockSpecs could use pipeline_mode=pl.Buffered(1) to halve their VMEM
    # footprint; irrelevant at these sizes, so kept default for portability.
    out = pl.pallas_call(
        kernel,
        out_shape=jax.ShapeDtypeStruct((b, c, N), x.dtype),
        grid_spec=pltpu.PrefetchScalarGridSpec(
            num_scalar_prefetch=0,
            grid=(N // tn,),
            in_specs=[
                pl.BlockSpec((b, c, tn), lambda i: (0, 0, i)),       # x slab
                pl.BlockSpec((c, c), lambda i: (0, 0)),              # linear W
                pl.BlockSpec((c, 1), lambda i: (0, 0)),              # linear b
                pl.BlockSpec((L, 3 * c, c), lambda i: (0, 0, 0)),    # fused QKV
                pl.BlockSpec((L, c, c), lambda i: (0, 0, 0)),        # folded FFN
            ],
            out_specs=pl.BlockSpec((b, c, tn), lambda i: (0, 0, i)),
        ),
        compiler_params=pltpu.CompilerParams(
            dimension_semantics=("parallel",),
            vmem_limit_bytes=vmem_limit),
    )(xc, prep['wl'], prep['bl'], prep['wqkv'], prep['w12'])

    return out.reshape(b, c, H, W)


def reference_forward(x, params):
    """Pure-JAX f32 reference mirroring the PyTorch forward, for verification."""
    b, c, H, W = x.shape
    N = H * W
    p = jnp.transpose(x.reshape(b, c, N), (2, 0, 1)).astype(jnp.float32)
    xx = p + p @ params['linear_w'].T + params['linear_b']
    L = params['wq'].shape[0]
    for l in range(L):
        q = xx @ params['wq'][l].T
        k = xx @ params['wk'][l].T
        v = xx @ params['wv'][l].T
        q = jax.nn.softmax(q, axis=-1) * (c ** -0.5)
        k = jax.nn.softmax(k, axis=-2)
        context = jnp.einsum('cnd,cne->cde', k, v)
        attn = jnp.einsum('cnd,cde->cne', q, context)
        xx = attn + xx
        xx = (xx @ params['w1'][l].T) @ params['w2'][l].T + xx
    return jnp.transpose(xx, (1, 2, 0)).reshape(b, c, H, W)


def make_params(key, c, num_layers):
    """Deterministic init mimicking nn.Linear default uniform(-1/sqrt(c), 1/sqrt(c))."""
    bound = 1.0 / (c ** 0.5)
    keys = jax.random.split(key, 7)
    u = lambda k, shape: jax.random.uniform(k, shape, jnp.float32, -bound, bound)
    return {
        'linear_w': u(keys[0], (c, c)),
        'linear_b': u(keys[1], (c,)),
        'wq': u(keys[2], (num_layers, c, c)),
        'wk': u(keys[3], (num_layers, c, c)),
        'wv': u(keys[4], (num_layers, c, c)),
        'w1': u(keys[5], (num_layers, c, c)),
        'w2': u(keys[6], (num_layers, c, c)),
    }


if __name__ == "__main__":
    b, c, H, W = 2, 32, 16, 16        # c1 == c2 == 32, so self.conv is None
    num_layers = 2                    # N = 256

    root = jax.random.PRNGKey(0)
    kx, kp = jax.random.split(root)
    x = jax.random.normal(kx, (b, c, H, W), jnp.float32)
    params = make_params(kp, c, num_layers)

    ref = jax.block_until_ready(reference_forward(x, params))

    # f32 matmul path: only re-association / fold rounding differs.
    prep_f32 = prepare_params(params, matmul_dtype=jnp.float32)
    out_f32 = jax.block_until_ready(linear_transformer_block(x, prep_f32))
    assert out_f32.shape == (b, c, H, W)
    err32 = float(jnp.max(jnp.abs(out_f32 - ref)))
    assert err32 < 1e-2, f"f32 max abs err {err32}"

    # default fast path: bf16 MXU operands, f32 accumulation / softmax.
    prep_bf16 = prepare_params(params, matmul_dtype=jnp.bfloat16)
    out_bf16 = jax.block_until_ready(linear_transformer_block(x, prep_bf16))
    assert out_bf16.shape == (b, c, H, W)
    errbf = float(jnp.max(jnp.abs(out_bf16 - ref)))
    assert errbf < 1e-1, f"bf16 max abs err {errbf}"

    print("KERNEL_OK")
</pallas_src>

<mosaic_0001>
module attributes {stable_mosaic.version = 11 : i64} {
  func.func @_ltb_kernel(%arg0: i32, %arg1: memref<2x32x256xf32, #tpu.memory_space<vmem>>, %arg2: memref<32x32xf32, #tpu.memory_space<vmem>>, %arg3: memref<32x1xf32, #tpu.memory_space<vmem>>, %arg4: memref<2x96x32xf32, #tpu.memory_space<vmem>>, %arg5: memref<2x32x32xf32, #tpu.memory_space<vmem>>, %arg6: memref<2x32x256xf32, #tpu.memory_space<vmem>>) attributes {dimension_semantics = [#tpu.dimension_semantics<parallel>], iteration_bounds = array<i64: 1>, scalar_prefetch = 0 : i64, scratch_operands = 0 : i64, tpu.core_type = #tpu.core_type<tc>, window_params = [{transform_indices = @transform_0, window_bounds = array<i64: 2, 32, 256>}, {pipeline_mode = #tpu.pipeline_mode<synchronous>, transform_indices = @transform_1, window_bounds = array<i64: 32, 32>}, {pipeline_mode = #tpu.pipeline_mode<synchronous>, transform_indices = @transform_2, window_bounds = array<i64: 32, 1>}, {pipeline_mode = #tpu.pipeline_mode<synchronous>, transform_indices = @transform_3, window_bounds = array<i64: 2, 96, 32>}, {pipeline_mode = #tpu.pipeline_mode<synchronous>, transform_indices = @transform_4, window_bounds = array<i64: 2, 32, 32>}, {transform_indices = @transform_5, window_bounds = array<i64: 2, 32, 256>}]} {
    %c0 = arith.constant 0 : index
    %c0_0 = arith.constant 0 : index
    %0 = vector.load %arg2[%c0, %c0_0] : memref<32x32xf32, #tpu.memory_space<vmem>>, vector<32x32xf32>
    %c0_1 = arith.constant 0 : index
    %c0_2 = arith.constant 0 : index
    %1 = vector.load %arg3[%c0_1, %c0_2] : memref<32x1xf32, #tpu.memory_space<vmem>>, vector<32x1xf32>
    %c0_3 = arith.constant 0 : index
    %c0_4 = arith.constant 0 : index
    %c0_5 = arith.constant 0 : index
    %2 = vector.load %arg1[%c0_3, %c0_4, %c0_5] : memref<2x32x256xf32, #tpu.memory_space<vmem>>, vector<1x32x256xf32>
    %3 = vector.shape_cast %2 : vector<1x32x256xf32> to vector<32x256xf32>
    %4 = vector.broadcast %1 : vector<32x1xf32> to vector<32x256xf32>
    %5 = arith.addf %3, %4 : vector<32x256xf32>
    %cst = arith.constant dense<0.000000e+00> : vector<32x256xf32>
    %6 = tpu.matmul %0, %3, %cst {dimension_numbers = #tpu.dot_dimension_numbers<[1], [0], [0], [1], [0, 0, 1, 1], [], []>} : vector<32x32xf32>, vector<32x256xf32>, vector<32x256xf32> -> vector<32x256xf32>
    %7 = arith.addf %5, %6 : vector<32x256xf32>
    %c1 = arith.constant 1 : index
    %c0_6 = arith.constant 0 : index
    %c0_7 = arith.constant 0 : index
    %8 = vector.load %arg1[%c1, %c0_6, %c0_7] : memref<2x32x256xf32, #tpu.memory_space<vmem>>, vector<1x32x256xf32>
    %9 = vector.shape_cast %8 : vector<1x32x256xf32> to vector<32x256xf32>
    %10 = vector.broadcast %1 : vector<32x1xf32> to vector<32x256xf32>
    %11 = arith.addf %9, %10 : vector<32x256xf32>
    %cst_8 = arith.constant dense<0.000000e+00> : vector<32x256xf32>
    %12 = tpu.matmul %0, %9, %cst_8 {dimension_numbers = #tpu.dot_dimension_numbers<[1], [0], [0], [1], [0, 0, 1, 1], [], []>} : vector<32x32xf32>, vector<32x256xf32>, vector<32x256xf32> -> vector<32x256xf32>
    %13 = arith.addf %11, %12 : vector<32x256xf32>
    %c0_9 = arith.constant 0 : index
    %c0_10 = arith.constant 0 : index
    %c0_11 = arith.constant 0 : index
    %14 = vector.load %arg4[%c0_9, %c0_10, %c0_11] : memref<2x96x32xf32, #tpu.memory_space<vmem>>, vector<1x96x32xf32>
    %15 = vector.shape_cast %14 : vector<1x96x32xf32> to vector<96x32xf32>
    %c0_12 = arith.constant 0 : index
    %c0_13 = arith.constant 0 : index
    %c0_14 = arith.constant 0 : index
    %16 = vector.load %arg5[%c0_12, %c0_13, %c0_14] : memref<2x32x32xf32, #tpu.memory_space<vmem>>, vector<1x32x32xf32>
    %17 = vector.shape_cast %16 : vector<1x32x32xf32> to vector<32x32xf32>
    %cst_15 = arith.constant dense<0.000000e+00> : vector<96x256xf32>
    %18 = tpu.matmul %15, %7, %cst_15 {dimension_numbers = #tpu.dot_dimension_numbers<[1], [0], [0], [1], [0, 0, 1, 1], [], []>} : vector<96x32xf32>, vector<32x256xf32>, vector<96x256xf32> -> vector<96x256xf32>
    %19 = vector.extract_strided_slice %18 {offsets = [0, 0], sizes = [32, 256], strides = [1, 1]} : vector<96x256xf32> to vector<32x256xf32>
    %20 = vector.extract_strided_slice %18 {offsets = [32, 0], sizes = [32, 256], strides = [1, 1]} : vector<96x256xf32> to vector<32x256xf32>
    %21 = vector.extract_strided_slice %18 {offsets = [64, 0], sizes = [32, 256], strides = [1, 1]} : vector<96x256xf32> to vector<32x256xf32>
    %cst_16 = arith.constant dense<0xFF800000> : vector<256xf32>
    %22 = vector.multi_reduction <maximumf>, %19, %cst_16 [0] : vector<32x256xf32> to vector<256xf32>
    %23 = vector.shape_cast %22 : vector<256xf32> to vector<1x256xf32>
    %24 = vector.broadcast %23 : vector<1x256xf32> to vector<32x256xf32>
    %25 = arith.subf %19, %24 : vector<32x256xf32>
    %26 = math.exp %25 : vector<32x256xf32>
    %cst_17 = arith.constant dense<0.000000e+00> : vector<256xf32>
    %27 = vector.multi_reduction <add>, %26, %cst_17 [0] : vector<32x256xf32> to vector<256xf32>
    %28 = vector.shape_cast %27 : vector<256xf32> to vector<1x256xf32>
    %cst_18 = arith.constant 0.176776692 : f32
    %29 = vector.broadcast %cst_18 : f32 to vector<1x256xf32>
    %30 = arith.divf %29, %28 : vector<1x256xf32>
    %31 = vector.broadcast %30 : vector<1x256xf32> to vector<32x256xf32>
    %32 = arith.mulf %26, %31 : vector<32x256xf32>
    %cst_19 = arith.constant dense<0.000000e+00> : vector<96x256xf32>
    %33 = tpu.matmul %15, %13, %cst_19 {dimension_numbers = #tpu.dot_dimension_numbers<[1], [0], [0], [1], [0, 0, 1, 1], [], []>} : vector<96x32xf32>, vector<32x256xf32>, vector<96x256xf32> -> vector<96x256xf32>
    %34 = vector.extract_strided_slice %33 {offsets = [0, 0], sizes = [32, 256], strides = [1, 1]} : vector<96x256xf32> to vector<32x256xf32>
    %35 = vector.extract_strided_slice %33 {offsets = [32, 0], sizes = [32, 256], strides = [1, 1]} : vector<96x256xf32> to vector<32x256xf32>
    %36 = vector.extract_strided_slice %33 {offsets = [64, 0], sizes = [32, 256], strides = [1, 1]} : vector<96x256xf32> to vector<32x256xf32>
    %cst_20 = arith.constant dense<0xFF800000> : vector<256xf32>
    %37 = vector.multi_reduction <maximumf>, %34, %cst_20 [0] : vector<32x256xf32> to vector<256xf32>
    %38 = vector.shape_cast %37 : vector<256xf32> to vector<1x256xf32>
    %39 = vector.broadcast %38 : vector<1x256xf32> to vector<32x256xf32>
    %40 = arith.subf %34, %39 : vector<32x256xf32>
    %41 = math.exp %40 : vector<32x256xf32>
    %cst_21 = arith.constant dense<0.000000e+00> : vector<256xf32>
    %42 = vector.multi_reduction <add>, %41, %cst_21 [0] : vector<32x256xf32> to vector<256xf32>
    %43 = vector.shape_cast %42 : vector<256xf32> to vector<1x256xf32>
    %cst_22 = arith.constant 0.176776692 : f32
    %44 = vector.broadcast %cst_22 : f32 to vector<1x256xf32>
    %45 = arith.divf %44, %43 : vector<1x256xf32>
    %46 = vector.broadcast %45 : vector<1x256xf32> to vector<32x256xf32>
    %47 = arith.mulf %41, %46 : vector<32x256xf32>
    %48 = arith.maximumf %20, %35 : vector<32x256xf32>
    %49 = arith.subf %20, %48 : vector<32x256xf32>
    %50 = math.exp %49 : vector<32x256xf32>
    %51 = arith.subf %35, %48 : vector<32x256xf32>
    %52 = math.exp %51 : vector<32x256xf32>
    %53 = arith.addf %50, %52 : vector<32x256xf32>
    %cst_23 = arith.constant 1.000000e+00 : f32
    %54 = vector.broadcast %cst_23 : f32 to vector<32x256xf32>
    %55 = arith.divf %54, %53 : vector<32x256xf32>
    %56 = arith.mulf %50, %55 : vector<32x256xf32>
    %57 = arith.mulf %52, %55 : vector<32x256xf32>
    %58 = arith.mulf %32, %56 : vector<32x256xf32>
    %cst_24 = arith.constant dense<0.000000e+00> : vector<256xf32>
    %59 = vector.multi_reduction <add>, %58, %cst_24 [0] : vector<32x256xf32> to vector<256xf32>
    %60 = vector.shape_cast %59 : vector<256xf32> to vector<1x256xf32>
    %61 = vector.broadcast %60 : vector<1x256xf32> to vector<32x256xf32>
    %62 = arith.mulf %61, %21 : vector<32x256xf32>
    %63 = arith.mulf %32, %57 : vector<32x256xf32>
    %cst_25 = arith.constant dense<0.000000e+00> : vector<256xf32>
    %64 = vector.multi_reduction <add>, %63, %cst_25 [0] : vector<32x256xf32> to vector<256xf32>
    %65 = vector.shape_cast %64 : vector<256xf32> to vector<1x256xf32>
    %66 = vector.broadcast %65 : vector<1x256xf32> to vector<32x256xf32>
    %67 = arith.mulf %66, %36 : vector<32x256xf32>
    %68 = arith.addf %62, %67 : vector<32x256xf32>
    %69 = arith.addf %7, %68 : vector<32x256xf32>
    %cst_26 = arith.constant dense<0.000000e+00> : vector<32x256xf32>
    %70 = tpu.matmul %17, %69, %cst_26 {dimension_numbers = #tpu.dot_dimension_numbers<[1], [0], [0], [1], [0, 0, 1, 1], [], []>} : vector<32x32xf32>, vector<32x256xf32>, vector<32x256xf32> -> vector<32x256xf32>
    %71 = arith.addf %69, %70 : vector<32x256xf32>
    %72 = arith.mulf %47, %56 : vector<32x256xf32>
    %cst_27 = arith.constant dense<0.000000e+00> : vector<256xf32>
    %73 = vector.multi_reduction <add>, %72, %cst_27 [0] : vector<32x256xf32> to vector<256xf32>
    %74 = vector.shape_cast %73 : vector<256xf32> to vector<1x256xf32>
    %75 = vector.broadcast %74 : vector<1x256xf32> to vector<32x256xf32>
    %76 = arith.mulf %75, %21 : vector<32x256xf32>
    %77 = arith.mulf %47, %57 : vector<32x256xf32>
    %cst_28 = arith.constant dense<0.000000e+00> : vector<256xf32>
    %78 = vector.multi_reduction <add>, %77, %cst_28 [0] : vector<32x256xf32> to vector<256xf32>
    %79 = vector.shape_cast %78 : vector<256xf32> to vector<1x256xf32>
    %80 = vector.broadcast %79 : vector<1x256xf32> to vector<32x256xf32>
    %81 = arith.mulf %80, %36 : vector<32x256xf32>
    %82 = arith.addf %76, %81 : vector<32x256xf32>
    %83 = arith.addf %13, %82 : vector<32x256xf32>
    %cst_29 = arith.constant dense<0.000000e+00> : vector<32x256xf32>
    %84 = tpu.matmul %17, %83, %cst_29 {dimension_numbers = #tpu.dot_dimension_numbers<[1], [0], [0], [1], [0, 0, 1, 1], [], []>} : vector<32x32xf32>, vector<32x256xf32>, vector<32x256xf32> -> vector<32x256xf32>
    %85 = arith.addf %83, %84 : vector<32x256xf32>
    %c1_30 = arith.constant 1 : index
    %c0_31 = arith.constant 0 : index
    %c0_32 = arith.constant 0 : index
    %86 = vector.load %arg4[%c1_30, %c0_31, %c0_32] : memref<2x96x32xf32, #tpu.memory_space<vmem>>, vector<1x96x32xf32>
    %87 = vector.shape_cast %86 : vector<1x96x32xf32> to vector<96x32xf32>
    %c1_33 = arith.constant 1 : index
    %c0_34 = arith.constant 0 : index
    %c0_35 = arith.constant 0 : index
    %88 = vector.load %arg5[%c1_33, %c0_34, %c0_35] : memref<2x32x32xf32, #tpu.memory_space<vmem>>, vector<1x32x32xf32>
    %89 = vector.shape_cast %88 : vector<1x32x32xf32> to vector<32x32xf32>
    %cst_36 = arith.constant dense<0.000000e+00> : vector<96x256xf32>
    %90 = tpu.matmul %87, %71, %cst_36 {dimension_numbers = #tpu.dot_dimension_numbers<[1], [0], [0], [1], [0, 0, 1, 1], [], []>} : vector<96x32xf32>, vector<32x256xf32>, vector<96x256xf32> -> vector<96x256xf32>
    %91 = vector.extract_strided_slice %90 {offsets = [0, 0], sizes = [32, 256], strides = [1, 1]} : vector<96x256xf32> to vector<32x256xf32>
    %92 = vector.extract_strided_slice %90 {offsets = [32, 0], sizes = [32, 256], strides = [1, 1]} : vector<96x256xf32> to vector<32x256xf32>
    %93 = vector.extract_strided_slice %90 {offsets = [64, 0], sizes = [32, 256], strides = [1, 1]} : vector<96x256xf32> to vector<32x256xf32>
    %cst_37 = arith.constant dense<0xFF800000> : vector<256xf32>
    %94 = vector.multi_reduction <maximumf>, %91, %cst_37 [0] : vector<32x256xf32> to vector<256xf32>
    %95 = vector.shape_cast %94 : vector<256xf32> to vector<1x256xf32>
    %96 = vector.broadcast %95 : vector<1x256xf32> to vector<32x256xf32>
    %97 = arith.subf %91, %96 : vector<32x256xf32>
    %98 = math.exp %97 : vector<32x256xf32>
    %cst_38 = arith.constant dense<0.000000e+00> : vector<256xf32>
    %99 = vector.multi_reduction <add>, %98, %cst_38 [0] : vector<32x256xf32> to vector<256xf32>
    %100 = vector.shape_cast %99 : vector<256xf32> to vector<1x256xf32>
    %cst_39 = arith.constant 0.176776692 : f32
    %101 = vector.broadcast %cst_39 : f32 to vector<1x256xf32>
    %102 = arith.divf %101, %100 : vector<1x256xf32>
    %103 = vector.broadcast %102 : vector<1x256xf32> to vector<32x256xf32>
    %104 = arith.mulf %98, %103 : vector<32x256xf32>
    %cst_40 = arith.constant dense<0.000000e+00> : vector<96x256xf32>
    %105 = tpu.matmul %87, %85, %cst_40 {dimension_numbers = #tpu.dot_dimension_numbers<[1], [0], [0], [1], [0, 0, 1, 1], [], []>} : vector<96x32xf32>, vector<32x256xf32>, vector<96x256xf32> -> vector<96x256xf32>
    %106 = vector.extract_strided_slice %105 {offsets = [0, 0], sizes = [32, 256], strides = [1, 1]} : vector<96x256xf32> to vector<32x256xf32>
    %107 = vector.extract_strided_slice %105 {offsets = [32, 0], sizes = [32, 256], strides = [1, 1]} : vector<96x256xf32> to vector<32x256xf32>
    %108 = vector.extract_strided_slice %105 {offsets = [64, 0], sizes = [32, 256], strides = [1, 1]} : vector<96x256xf32> to vector<32x256xf32>
    %cst_41 = arith.constant dense<0xFF800000> : vector<256xf32>
    %109 = vector.multi_reduction <maximumf>, %106, %cst_41 [0] : vector<32x256xf32> to vector<256xf32>
    %110 = vector.shape_cast %109 : vector<256xf32> to vector<1x256xf32>
    %111 = vector.broadcast %110 : vector<1x256xf32> to vector<32x256xf32>
    %112 = arith.subf %106, %111 : vector<32x256xf32>
    %113 = math.exp %112 : vector<32x256xf32>
    %cst_42 = arith.constant dense<0.000000e+00> : vector<256xf32>
    %114 = vector.multi_reduction <add>, %113, %cst_42 [0] : vector<32x256xf32> to vector<256xf32>
    %115 = vector.shape_cast %114 : vector<256xf32> to vector<1x256xf32>
    %cst_43 = arith.constant 0.176776692 : f32
    %116 = vector.broadcast %cst_43 : f32 to vector<1x256xf32>
    %117 = arith.divf %116, %115 : vector<1x256xf32>
    %118 = vector.broadcast %117 : vector<1x256xf32> to vector<32x256xf32>
    %119 = arith.mulf %113, %118 : vector<32x256xf32>
    %120 = arith.maximumf %92, %107 : vector<32x256xf32>
    %121 = arith.subf %92, %120 : vector<32x256xf32>
    %122 = math.exp %121 : vector<32x256xf32>
    %123 = arith.subf %107, %120 : vector<32x256xf32>
    %124 = math.exp %123 : vector<32x256xf32>
    %125 = arith.addf %122, %124 : vector<32x256xf32>
    %cst_44 = arith.constant 1.000000e+00 : f32
    %126 = vector.broadcast %cst_44 : f32 to vector<32x256xf32>
    %127 = arith.divf %126, %125 : vector<32x256xf32>
    %128 = arith.mulf %122, %127 : vector<32x256xf32>
    %129 = arith.mulf %124, %127 : vector<32x256xf32>
    %130 = arith.mulf %104, %128 : vector<32x256xf32>
    %cst_45 = arith.constant dense<0.000000e+00> : vector<256xf32>
    %131 = vector.multi_reduction <add>, %130, %cst_45 [0] : vector<32x256xf32> to vector<256xf32>
    %132 = vector.shape_cast %131 : vector<256xf32> to vector<1x256xf32>
    %133 = vector.broadcast %132 : vector<1x256xf32> to vector<32x256xf32>
    %134 = arith.mulf %133, %93 : vector<32x256xf32>
    %135 = arith.mulf %104, %129 : vector<32x256xf32>
    %cst_46 = arith.constant dense<0.000000e+00> : vector<256xf32>
    %136 = vector.multi_reduction <add>, %135, %cst_46 [0] : vector<32x256xf32> to vector<256xf32>
    %137 = vector.shape_cast %136 : vector<256xf32> to vector<1x256xf32>
    %138 = vector.broadcast %137 : vector<1x256xf32> to vector<32x256xf32>
    %139 = arith.mulf %138, %108 : vector<32x256xf32>
    %140 = arith.addf %134, %139 : vector<32x256xf32>
    %141 = arith.addf %71, %140 : vector<32x256xf32>
    %cst_47 = arith.constant dense<0.000000e+00> : vector<32x256xf32>
    %142 = tpu.matmul %89, %141, %cst_47 {dimension_numbers = #tpu.dot_dimension_numbers<[1], [0], [0], [1], [0, 0, 1, 1], [], []>} : vector<32x32xf32>, vector<32x256xf32>, vector<32x256xf32> -> vector<32x256xf32>
    %143 = arith.addf %141, %142 : vector<32x256xf32>
    %144 = arith.mulf %119, %128 : vector<32x256xf32>
    %cst_48 = arith.constant dense<0.000000e+00> : vector<256xf32>
    %145 = vector.multi_reduction <add>, %144, %cst_48 [0] : vector<32x256xf32> to vector<256xf32>
    %146 = vector.shape_cast %145 : vector<256xf32> to vector<1x256xf32>
    %147 = vector.broadcast %146 : vector<1x256xf32> to vector<32x256xf32>
    %148 = arith.mulf %147, %93 : vector<32x256xf32>
    %149 = arith.mulf %119, %129 : vector<32x256xf32>
    %cst_49 = arith.constant dense<0.000000e+00> : vector<256xf32>
    %150 = vector.multi_reduction <add>, %149, %cst_49 [0] : vector<32x256xf32> to vector<256xf32>
    %151 = vector.shape_cast %150 : vector<256xf32> to vector<1x256xf32>
    %152 = vector.broadcast %151 : vector<1x256xf32> to vector<32x256xf32>
    %153 = arith.mulf %152, %108 : vector<32x256xf32>
    %154 = arith.addf %148, %153 : vector<32x256xf32>
    %155 = arith.addf %85, %154 : vector<32x256xf32>
    %cst_50 = arith.constant dense<0.000000e+00> : vector<32x256xf32>
    %156 = tpu.matmul %89, %155, %cst_50 {dimension_numbers = #tpu.dot_dimension_numbers<[1], [0], [0], [1], [0, 0, 1, 1], [], []>} : vector<32x32xf32>, vector<32x256xf32>, vector<32x256xf32> -> vector<32x256xf32>
    %157 = arith.addf %155, %156 : vector<32x256xf32>
    %c0_51 = arith.constant 0 : index
    %c0_52 = arith.constant 0 : index
    %c0_53 = arith.constant 0 : index
    %158 = vector.load %arg6[%c0_51, %c0_52, %c0_53] : memref<2x32x256xf32, #tpu.memory_space<vmem>>, vector<1x32x256xf32>
    %159 = vector.shape_cast %158 : vector<1x32x256xf32> to vector<32x256xf32>
    %160 = vector.shape_cast %143 : vector<32x256xf32> to vector<1x32x256xf32>
    tpu.vector_store %arg6[%c0_51, %c0_52, %c0_53], %160 {strides = array<i32>} : memref<2x32x256xf32, #tpu.memory_space<vmem>>, vector<1x32x256xf32>,
    %c1_54 = arith.constant 1 : index
    %c0_55 = arith.constant 0 : index
    %c0_56 = arith.constant 0 : index
    %161 = vector.load %arg6[%c1_54, %c0_55, %c0_56] : memref<2x32x256xf32, #tpu.memory_space<vmem>>, vector<1x32x256xf32>
    %162 = vector.shape_cast %161 : vector<1x32x256xf32> to vector<32x256xf32>
    %163 = vector.shape_cast %157 : vector<32x256xf32> to vector<1x32x256xf32>
    tpu.vector_store %arg6[%c1_54, %c0_55, %c0_56], %163 {strides = array<i32>} : memref<2x32x256xf32, #tpu.memory_space<vmem>>, vector<1x32x256xf32>,
    return
  }
  func.func @transform_0(%arg0: i32) -> (i32, i32, i32) {
    %c0_i32 = arith.constant 0 : i32
    %c0_i32_0 = arith.constant 0 : i32
    %c0_i32_1 = arith.constant 0 : i32
    return %c0_i32, %c0_i32_0, %arg0 : i32, i32, i32
  }
  func.func @transform_1(%arg0: i32) -> (i32, i32) {
    %c0_i32 = arith.constant 0 : i32
    %c0_i32_0 = arith.constant 0 : i32
    %c0_i32_1 = arith.constant 0 : i32
    return %c0_i32, %c0_i32_0 : i32, i32
  }
  func.func @transform_2(%arg0: i32) -> (i32, i32) {
    %c0_i32 = arith.constant 0 : i32
    %c0_i32_0 = arith.constant 0 : i32
    %c0_i32_1 = arith.constant 0 : i32
    return %c0_i32, %c0_i32_0 : i32, i32
  }
  func.func @transform_3(%arg0: i32) -> (i32, i32, i32) {
    %c0_i32 = arith.constant 0 : i32
    %c0_i32_0 = arith.constant 0 : i32
    %c0_i32_1 = arith.constant 0 : i32
    %c0_i32_2 = arith.constant 0 : i32
    return %c0_i32, %c0_i32_0, %c0_i32_1 : i32, i32, i32
  }
  func.func @transform_4(%arg0: i32) -> (i32, i32, i32) {
    %c0_i32 = arith.constant 0 : i32
    %c0_i32_0 = arith.constant 0 : i32
    %c0_i32_1 = arith.constant 0 : i32
    %c0_i32_2 = arith.constant 0 : i32
    return %c0_i32, %c0_i32_0, %c0_i32_1 : i32, i32, i32
  }
  func.func @transform_5(%arg0: i32) -> (i32, i32, i32) {
    %c0_i32 = arith.constant 0 : i32
    %c0_i32_0 = arith.constant 0 : i32
    %c0_i32_1 = arith.constant 0 : i32
    return %c0_i32, %c0_i32_0, %arg0 : i32, i32, i32
  }
}

</mosaic_0001>

<llo_original>
// kernel: tpu_custom_call.1
$region0: #{tpu_custom_call.1}
  #allocation0 [shape = 'u32[]', space=smem, size = 0x4, offset = 0x4, fixed_abs, tag = 'smem constant byte address 0x4 - core index']
  #allocation1 [shape = 'u32[72,128]{1,0:T(1,128)}', space=vmem, size = 0x9000, scoped, tag = 'internal scratch']
  %s0 = inlined_call_operand.vmem [shape: f32[2,32,256], index: 0, kind: input, shape index: {}]
  %s1 = inlined_call_operand.vmem [shape: f32[32,32], index: 1, kind: input, shape index: {}]
  %s2 = inlined_call_operand.vmem [shape: f32[32,1], index: 2, kind: input, shape index: {}]
  %s3 = inlined_call_operand.vmem [shape: f32[2,96,32], index: 3, kind: input, shape index: {}]
  %s4 = inlined_call_operand.vmem [shape: f32[2,32,32], index: 4, kind: input, shape index: {}]
  %s5 = inlined_call_operand.hbm [shape: f32[2,32,256], index: 5, kind: output, shape index: {}]
  %s6 = sld [smem:[#allocation0]]
  $region30: #{tpu_custom_call.1} parent=0
    _
  %s8 = ssub.s32 1, %s6
  %s9 = scalar_select 0, %s8, %s6
  $region1: #{tpu_custom_call.1} parent=0
    #allocation2 [shape = 'u8[65536]{0}', space=vmem, size = 0x10000, scoped, tag = 'output window, operand 0, single buffered']
    #allocation3 [shape = 's32[1]{0}', space=sflag, size = 0x4, scoped, tag = 'scoped memory for tpu_custom_call.1']
    %10 = vsyncpa [#allocation3], 0
    // Predicated region
    $region2: #{tpu_custom_call.1} parent=1 // pred_check
      _
    $region3: #{tpu_custom_call.1} parent=1 // pred_check_branch
      %12 = sbr.rel (0) target = $region5
    $region4: #{tpu_custom_call.1} parent=1 // pred_region
      _
    $region5: #{tpu_custom_call.1} parent=1 // pred_fallthru
      _
    // Predicated region
    $region6: #{tpu_custom_call.1} parent=1 // pred_check
      _
    $region7: #{tpu_custom_call.1} parent=1 // pred_check_branch
      %14 = sbr.rel (0) target = $region9
    $region8: #{tpu_custom_call.1} parent=1 // pred_region
      _
    $region9: #{tpu_custom_call.1} parent=1 // pred_fallthru
      _
    // Predicated region
    $region10: #{tpu_custom_call.1} parent=1 // pred_check
      _
    $region11: #{tpu_custom_call.1} parent=1 // pred_check_branch
      %16 = sbr.rel (0) target = $region13
    $region12: #{tpu_custom_call.1} parent=1 // pred_region
      _
    $region13: #{tpu_custom_call.1} parent=1 // pred_fallthru
      _
    // Predicated region
    $region14: #{tpu_custom_call.1} parent=1 // pred_check
      _
    $region15: #{tpu_custom_call.1} parent=1 // pred_check_branch
      %18 = sbr.rel (0) target = $region17
    $region16: #{tpu_custom_call.1} parent=1 // pred_region
      _
    $region17: #{tpu_custom_call.1} parent=1 // pred_fallthru
      _
    // Predicated region
    $region18: #{tpu_custom_call.1} parent=1 // pred_check
      _
    $region19: #{tpu_custom_call.1} parent=1 // pred_check_branch
      %20 = sbr.rel (0) target = $region21
    $region20: #{tpu_custom_call.1} parent=1 // pred_region
      _
    $region21: #{tpu_custom_call.1} parent=1 // pred_fallthru
      _
    %v21 = vld [vmem:[%s1] sm:$0xff]
    %v22 = vld [vmem:[%s1 + $0x8] sm:$0xff]
    %v23 = vld [vmem:[%s1 + $0x10] sm:$0xff]
    %v24 = vld [vmem:[%s1 + $0x18] sm:$0xff]
    %v25 = vld [vmem:[%s2] sm:$0xff]
    %v26 = vld [vmem:[%s2 + $0x8] sm:$0xff]
    %v27 = vld [vmem:[%s2 + $0x10] sm:$0xff]
    %v28 = vld [vmem:[%s2 + $0x18] sm:$0xff]
    %v29 = vld [vmem:[%s0] sm:$0xff]
    %v30 = vld [vmem:[%s0 + $0x8] sm:$0xff]
    %v31 = vld [vmem:[%s0 + $0x10] sm:$0xff]
    %v32 = vld [vmem:[%s0 + $0x18] sm:$0xff]
    %v33 = vld [vmem:[%s0 + $0x20] sm:$0xff]
    %v34 = vld [vmem:[%s0 + $0x28] sm:$0xff]
    %v35 = vld [vmem:[%s0 + $0x30] sm:$0xff]
    %v36 = vld [vmem:[%s0 + $0x38] sm:$0xff]
    %38 = vset.pattern.permute.xlu0 0
    %39 = vperm.xlu0 %38, %v25
    %v40 = vpop.permute.xlu0 %39
    %43 = vset.pattern.permute.xlu0 0
    %44 = vperm.xlu0 %43, %v26
    %v45 = vpop.permute.xlu0 %44
    %48 = vset.pattern.permute.xlu0 0
    %49 = vperm.xlu0 %48, %v27
    %v50 = vpop.permute.xlu0 %49
    %53 = vset.pattern.permute.xlu0 0
    %54 = vperm.xlu0 %53, %v28
    %v55 = vpop.permute.xlu0 %54
    %v57 = vadd.f32 %v29, %v40
    %v58 = vadd.f32 %v30, %v40
    %v59 = vadd.f32 %v31, %v45
    %v60 = vadd.f32 %v32, %v45
    %v61 = vadd.f32 %v33, %v50
    %v62 = vadd.f32 %v34, %v50
    %v63 = vadd.f32 %v35, %v55
    %v64 = vadd.f32 %v36, %v55
    %vm65 = vcmask 261120
    %v67 = vsel %vm65, %v21, 0
    %v70 = vsel %vm65, %v22, 0
    %v73 = vsel %vm65, %v23, 0
    %v76 = vsel %vm65, %v24, 0
    %78 = vmatpush.msra.mxu0 0.0
    %79 = vmatpush.msra.mxu0 0.0
    %80 = vmatpush.msra.mxu0 0.0
    %81 = vmatpush.msra.mxu0 0.0
    %82 = vmatpush.msra.mxu0 0.0
    %83 = vmatpush.msra.mxu0 0.0
    %84 = vmatpush.msra.mxu0 0.0
    %85 = vmatpush.msra.mxu0 0.0
    %86 = vmatpush.msra.mxu0 0.0
    %87 = vmatpush.msra.mxu0 0.0
    %88 = vmatpush.msra.mxu0 0.0
    %89 = vmatpush.msra.mxu0 0.0
    %90 = vmatpush.msra.mxu0 %v35
    %91 = vmatpush.msra.mxu0 %v33
    %92 = vmatpush.msra.mxu0 %v31
    %93 = vmatpush.msra.mxu0 %v29
    %94 = vmatmul.f32.gmra.mxu0 %v67
    %v95 = vpop.f32.mrf.mxu0
    %v96 = vadd.f32 0.0, %v95
    %97 = vmatmul.f32.gmra.mxu0 %v70
    %v98 = vpop.f32.mrf.mxu0
    %v99 = vadd.f32 0.0, %v98
    %100 = vmatmul.f32.gmra.mxu0 %v73
    %v101 = vpop.f32.mrf.mxu0
    %v102 = vadd.f32 0.0, %v101
    %103 = vmatmul.f32.gmra.mxu0 %v76
    %v104 = vpop.f32.mrf.mxu0
    %v105 = vadd.f32 0.0, %v104
    %106 = vdwg.mxu0
    %107 = vmatpush.msra.mxu0 0.0
    %108 = vmatpush.msra.mxu0 0.0
    %109 = vmatpush.msra.mxu0 0.0
    %110 = vmatpush.msra.mxu0 0.0
    %111 = vmatpush.msra.mxu0 0.0
    %112 = vmatpush.msra.mxu0 0.0
    %113 = vmatpush.msra.mxu0 0.0
    %114 = vmatpush.msra.mxu0 0.0
    %115 = vmatpush.msra.mxu0 0.0
    %116 = vmatpush.msra.mxu0 0.0
    %117 = vmatpush.msra.mxu0 0.0
    %118 = vmatpush.msra.mxu0 0.0
    %119 = vmatpush.msra.mxu0 %v36
    %120 = vmatpush.msra.mxu0 %v34
    %121 = vmatpush.msra.mxu0 %v32
    %122 = vmatpush.msra.mxu0 %v30
    %123 = vmatmul.f32.gmra.mxu0 %v67
    %v124 = vpop.f32.mrf.mxu0
    %v125 = vadd.f32 0.0, %v124
    %126 = vmatmul.f32.gmra.mxu0 %v70
    %v127 = vpop.f32.mrf.mxu0
    %v128 = vadd.f32 0.0, %v127
    %129 = vmatmul.f32.gmra.mxu0 %v73
    %v130 = vpop.f32.mrf.mxu0
    %v131 = vadd.f32 0.0, %v130
    %132 = vmatmul.f32.gmra.mxu0 %v76
    %v133 = vpop.f32.mrf.mxu0
    %v134 = vadd.f32 0.0, %v133
    %135 = vdwg.mxu0
    %v136 = vadd.f32 %v57, %v96
    %v137 = vadd.f32 %v58, %v125
    %v138 = vadd.f32 %v59, %v99
    %v139 = vadd.f32 %v60, %v128
    %v140 = vadd.f32 %v61, %v102
    %v141 = vadd.f32 %v62, %v131
    %v142 = vadd.f32 %v63, %v105
    %v143 = vadd.f32 %v64, %v134
    %s144 = scalar_lea.vmem %s0, 64
    %v145 = vld [vmem:[%s144] sm:$0xff]
    %v146 = vld [vmem:[%s144 + $0x8] sm:$0xff]
    %v147 = vld [vmem:[%s144 + $0x10] sm:$0xff]
    %v148 = vld [vmem:[%s144 + $0x18] sm:$0xff]
    %v149 = vld [vmem:[%s144 + $0x20] sm:$0xff]
    %v150 = vld [vmem:[%s144 + $0x28] sm:$0xff]
    %v151 = vld [vmem:[%s144 + $0x30] sm:$0xff]
    %v152 = vld [vmem:[%s144 + $0x38] sm:$0xff]
    %v153 = vadd.f32 %v145, %v40
    %v154 = vadd.f32 %v146, %v40
    %v155 = vadd.f32 %v147, %v45
    %v156 = vadd.f32 %v148, %v45
    %v157 = vadd.f32 %v149, %v50
    %v158 = vadd.f32 %v150, %v50
    %v159 = vadd.f32 %v151, %v55
    %v160 = vadd.f32 %v152, %v55
    %161 = vmatpush.msra.mxu0 0.0
    %162 = vmatpush.msra.mxu0 0.0
    %163 = vmatpush.msra.mxu0 0.0
    %164 = vmatpush.msra.mxu0 0.0
    %165 = vmatpush.msra.mxu0 0.0
    %166 = vmatpush.msra.mxu0 0.0
    %167 = vmatpush.msra.mxu0 0.0
    %168 = vmatpush.msra.mxu0 0.0
    %169 = vmatpush.msra.mxu0 0.0
    %170 = vmatpush.msra.mxu0 0.0
    %171 = vmatpush.msra.mxu0 0.0
    %172 = vmatpush.msra.mxu0 0.0
    %173 = vmatpush.msra.mxu0 %v151
    %174 = vmatpush.msra.mxu0 %v149
    %175 = vmatpush.msra.mxu0 %v147
    %176 = vmatpush.msra.mxu0 %v145
    %177 = vmatmul.f32.gmra.mxu0 %v67
    %v178 = vpop.f32.mrf.mxu0
    %v179 = vadd.f32 0.0, %v178
    %180 = vmatmul.f32.gmra.mxu0 %v70
    %v181 = vpop.f32.mrf.mxu0
    %v182 = vadd.f32 0.0, %v181
    %183 = vmatmul.f32.gmra.mxu0 %v73
    %v184 = vpop.f32.mrf.mxu0
    %v185 = vadd.f32 0.0, %v184
    %186 = vmatmul.f32.gmra.mxu0 %v76
    %v187 = vpop.f32.mrf.mxu0
    %v188 = vadd.f32 0.0, %v187
    %189 = vdwg.mxu0
    %190 = vmatpush.msra.mxu0 0.0
    %191 = vmatpush.msra.mxu0 0.0
    %192 = vmatpush.msra.mxu0 0.0
    %193 = vmatpush.msra.mxu0 0.0
    %194 = vmatpush.msra.mxu0 0.0
    %195 = vmatpush.msra.mxu0 0.0
    %196 = vmatpush.msra.mxu0 0.0
    %197 = vmatpush.msra.mxu0 0.0
    %198 = vmatpush.msra.mxu0 0.0
    %199 = vmatpush.msra.mxu0 0.0
    %200 = vmatpush.msra.mxu0 0.0
    %201 = vmatpush.msra.mxu0 0.0
    %202 = vmatpush.msra.mxu0 %v152
    %203 = vmatpush.msra.mxu0 %v150
    %204 = vmatpush.msra.mxu0 %v148
    %205 = vmatpush.msra.mxu0 %v146
    %206 = vmatmul.f32.gmra.mxu0 %v67
    %v207 = vpop.f32.mrf.mxu0
    %v208 = vadd.f32 0.0, %v207
    %209 = vmatmul.f32.gmra.mxu0 %v70
    %v210 = vpop.f32.mrf.mxu0
    %v211 = vadd.f32 0.0, %v210
    %212 = vmatmul.f32.gmra.mxu0 %v73
    %v213 = vpop.f32.mrf.mxu0
    %v214 = vadd.f32 0.0, %v213
    %215 = vmatmul.f32.gmra.mxu0 %v76
    %v216 = vpop.f32.mrf.mxu0
    %v217 = vadd.f32 0.0, %v216
    %218 = vdwg.mxu0
    %v219 = vadd.f32 %v153, %v179
    %v220 = vadd.f32 %v154, %v208
    %v221 = vadd.f32 %v155, %v182
    %v222 = vadd.f32 %v156, %v211
    %v223 = vadd.f32 %v157, %v185
    %v224 = vadd.f32 %v158, %v214
    %v225 = vadd.f32 %v159, %v188
    %v226 = vadd.f32 %v160, %v217
    %v227 = vld [vmem:[%s3] sm:$0xff]
    %v228 = vld [vmem:[%s3 + $0x8] sm:$0xff]
    %v229 = vld [vmem:[%s3 + $0x10] sm:$0xff]
    %v230 = vld [vmem:[%s3 + $0x18] sm:$0xff]
    %v231 = vld [vmem:[%s3 + $0x20] sm:$0xff]
    %v232 = vld [vmem:[%s3 + $0x28] sm:$0xff]
    %v233 = vld [vmem:[%s3 + $0x30] sm:$0xff]
    %v234 = vld [vmem:[%s3 + $0x38] sm:$0xff]
    %v235 = vld [vmem:[%s3 + $0x40] sm:$0xff]
    %v236 = vld [vmem:[%s3 + $0x48] sm:$0xff]
    %v237 = vld [vmem:[%s3 + $0x50] sm:$0xff]
    %v238 = vld [vmem:[%s3 + $0x58] sm:$0xff]
    %v239 = vld [vmem:[%s4] sm:$0xff]
    %v240 = vld [vmem:[%s4 + $0x8] sm:$0xff]
    %v241 = vld [vmem:[%s4 + $0x10] sm:$0xff]
    %v242 = vld [vmem:[%s4 + $0x18] sm:$0xff]
    %v244 = vsel %vm65, %v227, 0
    %v247 = vsel %vm65, %v228, 0
    %v250 = vsel %vm65, %v229, 0
    %v253 = vsel %vm65, %v230, 0
    %v256 = vsel %vm65, %v231, 0
    %v259 = vsel %vm65, %v232, 0
    %v262 = vsel %vm65, %v233, 0
    %v265 = vsel %vm65, %v234, 0
    %v268 = vsel %vm65, %v235, 0
    %v271 = vsel %vm65, %v236, 0
    %v274 = vsel %vm65, %v237, 0
    %v277 = vsel %vm65, %v238, 0
    %279 = vmatpush.msra.mxu0 0.0
    %280 = vmatpush.msra.mxu0 0.0
    %281 = vmatpush.msra.mxu0 0.0
    %282 = vmatpush.msra.mxu0 0.0
    %283 = vmatpush.msra.mxu0 0.0
    %284 = vmatpush.msra.mxu0 0.0
    %285 = vmatpush.msra.mxu0 0.0
    %286 = vmatpush.msra.mxu0 0.0
    %287 = vmatpush.msra.mxu0 0.0
    %288 = vmatpush.msra.mxu0 0.0
    %289 = vmatpush.msra.mxu0 0.0
    %290 = vmatpush.msra.mxu0 0.0
    %291 = vmatpush.msra.mxu0 %v142
    %292 = vmatpush.msra.mxu0 %v140
    %293 = vmatpush.msra.mxu0 %v138
    %294 = vmatpush.msra.mxu0 %v136
    %295 = vmatmul.f32.gmra.mxu0 %v244
    %v296 = vpop.f32.mrf.mxu0
    %v297 = vadd.f32 0.0, %v296
    %298 = vmatmul.f32.gmra.mxu0 %v247
    %v299 = vpop.f32.mrf.mxu0
    %v300 = vadd.f32 0.0, %v299
    %301 = vmatmul.f32.gmra.mxu0 %v250
    %v302 = vpop.f32.mrf.mxu0
    %v303 = vadd.f32 0.0, %v302
    %304 = vmatmul.f32.gmra.mxu0 %v253
    %v305 = vpop.f32.mrf.mxu0
    %v306 = vadd.f32 0.0, %v305
    %307 = vmatmul.f32.gmra.mxu0 %v256
    %v308 = vpop.f32.mrf.mxu0
    %v309 = vadd.f32 0.0, %v308
    %310 = vmatmul.f32.gmra.mxu0 %v259
    %v311 = vpop.f32.mrf.mxu0
    %v312 = vadd.f32 0.0, %v311
    %313 = vmatmul.f32.gmra.mxu0 %v262
    %v314 = vpop.f32.mrf.mxu0
    %v315 = vadd.f32 0.0, %v314
    %316 = vmatmul.f32.gmra.mxu0 %v265
    %v317 = vpop.f32.mrf.mxu0
    %v318 = vadd.f32 0.0, %v317
    %319 = vmatmul.f32.gmra.mxu0 %v268
    %v320 = vpop.f32.mrf.mxu0
    %v321 = vadd.f32 0.0, %v320
    %322 = vmatmul.f32.gmra.mxu0 %v271
    %v323 = vpop.f32.mrf.mxu0
    %v324 = vadd.f32 0.0, %v323
    %325 = vmatmul.f32.gmra.mxu0 %v274
    %v326 = vpop.f32.mrf.mxu0
    %v327 = vadd.f32 0.0, %v326
    %328 = vmatmul.f32.gmra.mxu0 %v277
    %v329 = vpop.f32.mrf.mxu0
    %v330 = vadd.f32 0.0, %v329
    %331 = vdwg.mxu0
    %332 = vmatpush.msra.mxu0 0.0
    %333 = vmatpush.msra.mxu0 0.0
    %334 = vmatpush.msra.mxu0 0.0
    %335 = vmatpush.msra.mxu0 0.0
    %336 = vmatpush.msra.mxu0 0.0
    %337 = vmatpush.msra.mxu0 0.0
    %338 = vmatpush.msra.mxu0 0.0
    %339 = vmatpush.msra.mxu0 0.0
    %340 = vmatpush.msra.mxu0 0.0
    %341 = vmatpush.msra.mxu0 0.0
    %342 = vmatpush.msra.mxu0 0.0
    %343 = vmatpush.msra.mxu0 0.0
    %344 = vmatpush.msra.mxu0 %v143
    %345 = vmatpush.msra.mxu0 %v141
    %346 = vmatpush.msra.mxu0 %v139
    %347 = vmatpush.msra.mxu0 %v137
    %348 = vmatmul.f32.gmra.mxu0 %v244
    %v349 = vpop.f32.mrf.mxu0
    %v350 = vadd.f32 0.0, %v349
    %351 = vmatmul.f32.gmra.mxu0 %v247
    %v352 = vpop.f32.mrf.mxu0
    %v353 = vadd.f32 0.0, %v352
    %354 = vmatmul.f32.gmra.mxu0 %v250
    %v355 = vpop.f32.mrf.mxu0
    %v356 = vadd.f32 0.0, %v355
    %357 = vmatmul.f32.gmra.mxu0 %v253
    %v358 = vpop.f32.mrf.mxu0
    %v359 = vadd.f32 0.0, %v358
    %360 = vmatmul.f32.gmra.mxu0 %v256
    %v361 = vpop.f32.mrf.mxu0
    %v362 = vadd.f32 0.0, %v361
    %363 = vmatmul.f32.gmra.mxu0 %v259
    %v364 = vpop.f32.mrf.mxu0
    %v365 = vadd.f32 0.0, %v364
    %366 = vmatmul.f32.gmra.mxu0 %v262
    %v367 = vpop.f32.mrf.mxu0
    %v368 = vadd.f32 0.0, %v367
    %369 = vmatmul.f32.gmra.mxu0 %v265
    %v370 = vpop.f32.mrf.mxu0
    %v371 = vadd.f32 0.0, %v370
    %372 = vmatmul.f32.gmra.mxu0 %v268
    %v373 = vpop.f32.mrf.mxu0
    %v374 = vadd.f32 0.0, %v373
    %375 = vmatmul.f32.gmra.mxu0 %v271
    %v376 = vpop.f32.mrf.mxu0
    %v377 = vadd.f32 0.0, %v376
    %378 = vmatmul.f32.gmra.mxu0 %v274
    %v379 = vpop.f32.mrf.mxu0
    %v380 = vadd.f32 0.0, %v379
    %381 = vmatmul.f32.gmra.mxu0 %v277
    %v382 = vpop.f32.mrf.mxu0
    %v383 = vadd.f32 0.0, %v382
    %384 = vdwg.mxu0
    %v385 = vmax.f32 %v297, %v303
    %v386 = vmax.f32 %v300, %v306
    %v387 = vmax.f32 %v385, %v386
    %v388 = vrot.slane %v387, 4
    %v389 = vmax.f32 %v387, %v388
    %v390 = vrot.slane %v389, 2
    %v391 = vmax.f32 %v389, %v390
    %v392 = vrot.slane %v391, 1
    %v393 = vmax.f32 %v391, %v392
    %v394 = vmax.f32 %v350, %v356
    %v395 = vmax.f32 %v353, %v359
    %v396 = vmax.f32 %v394, %v395
    %v397 = vrot.slane %v396, 4
    %v398 = vmax.f32 %v396, %v397
    %v399 = vrot.slane %v398, 2
    %v400 = vmax.f32 %v398, %v399
    %v401 = vrot.slane %v400, 1
    %v402 = vmax.f32 %v400, %v401
    %v403 = vsub.f32 %v297, %v393
    %v404 = vsub.f32 %v350, %v402
    %v405 = vsub.f32 %v300, %v393
    %v406 = vsub.f32 %v353, %v402
    %v407 = vsub.f32 %v303, %v393
    %v408 = vsub.f32 %v356, %v402
    %v409 = vsub.f32 %v306, %v393
    %v410 = vsub.f32 %v359, %v402
    %v411 = vmul.f32 %v403, 1.442695
    %v412 = vpow.pop %v411
    %v413 = vmul.f32 %v404, 1.442695
    %v414 = vpow.pop %v413
    %v415 = vmul.f32 %v405, 1.442695
    %v416 = vpow.pop %v415
    %v417 = vmul.f32 %v406, 1.442695
    %v418 = vpow.pop %v417
    %v419 = vmul.f32 %v407, 1.442695
    %v420 = vpow.pop %v419
    %v421 = vmul.f32 %v408, 1.442695
    %v422 = vpow.pop %v421
    %v423 = vmul.f32 %v409, 1.442695
    %v424 = vpow.pop %v423
    %v425 = vmul.f32 %v410, 1.442695
    %v426 = vpow.pop %v425
    %v427 = vadd.f32 %v412, %v416
    %v428 = vadd.f32 %v427, %v420
    %v429 = vadd.f32 %v428, %v424
    %v430 = vrot.slane %v429, 4
    %v431 = vadd.f32 %v429, %v430
    %v432 = vrot.slane %v431, 2
    %v433 = vadd.f32 %v431, %v432
    %v434 = vrot.slane %v433, 1
    %v435 = vadd.f32 %v433, %v434
    %v436 = vadd.f32 %v414, %v418
    %v437 = vadd.f32 %v436, %v422
    %v438 = vadd.f32 %v437, %v426
    %v439 = vrot.slane %v438, 4
    %v440 = vadd.f32 %v438, %v439
    %v441 = vrot.slane %v440, 2
    %v442 = vadd.f32 %v440, %v441
    %v443 = vrot.slane %v442, 1
    %v444 = vadd.f32 %v442, %v443
    %v445 = vrcp.pop %v435
    %v446 = vmul.f32 %v435, %v445
    %v447 = vsub.f32 1.0, %v446
    %v448 = vmul.f32 %v445, %v447
    %v449 = vadd.f32 %v445, %v448
    %vm450 = vweird.f32 %v435
    %vm451 = vweird.f32 %v445
    %vm452 = vmor %vm450, %vm451
    %v453 = vsel %vm452, %v445, %v449
    %v454 = vand.u32 2147483647, %v435
    %vm455 = vcmp.eq.f32.partialorder %v454, 8.507059e+37
    %v456 = vand.u32 %v435, 2147483648
    %v457 = vor.u32 1.1754944e-38, %v456
    %v458 = vsel %vm455, %v457, %v453
    %v459 = vmul.f32 0.17677669, %v458
    %v460 = vrcp.pop %v444
    %v461 = vmul.f32 %v444, %v460
    %v462 = vsub.f32 1.0, %v461
    %v463 = vmul.f32 %v460, %v462
    %v464 = vadd.f32 %v460, %v463
    %vm465 = vweird.f32 %v444
    %vm466 = vweird.f32 %v460
    %vm467 = vmor %vm465, %vm466
    %v468 = vsel %vm467, %v460, %v464
    %v469 = vand.u32 2147483647, %v444
    %vm470 = vcmp.eq.f32.partialorder %v469, 8.507059e+37
    %v471 = vand.u32 %v444, 2147483648
    %v472 = vor.u32 1.1754944e-38, %v471
    %v473 = vsel %vm470, %v472, %v468
    %v474 = vmul.f32 0.17677669, %v473
    %v475 = vmul.f32 %v412, %v459
    %v476 = vmul.f32 %v414, %v474
    %v477 = vmul.f32 %v416, %v459
    %v478 = vmul.f32 %v418, %v474
    %v479 = vmul.f32 %v420, %v459
    %v480 = vmul.f32 %v422, %v474
    %v481 = vmul.f32 %v424, %v459
    %v482 = vmul.f32 %v426, %v474
    %483 = vmatpush.msra.mxu0 0.0
    %484 = vmatpush.msra.mxu0 0.0
    %485 = vmatpush.msra.mxu0 0.0
    %486 = vmatpush.msra.mxu0 0.0
    %487 = vmatpush.msra.mxu0 0.0
    %488 = vmatpush.msra.mxu0 0.0
    %489 = vmatpush.msra.mxu0 0.0
    %490 = vmatpush.msra.mxu0 0.0
    %491 = vmatpush.msra.mxu0 0.0
    %492 = vmatpush.msra.mxu0 0.0
    %493 = vmatpush.msra.mxu0 0.0
    %494 = vmatpush.msra.mxu0 0.0
    %495 = vmatpush.msra.mxu0 %v225
    %496 = vmatpush.msra.mxu0 %v223
    %497 = vmatpush.msra.mxu0 %v221
    %498 = vmatpush.msra.mxu0 %v219
    %499 = vmatmul.f32.gmra.mxu0 %v244
    %v500 = vpop.f32.mrf.mxu0
    %v501 = vadd.f32 0.0, %v500
    %502 = vmatmul.f32.gmra.mxu0 %v247
    %v503 = vpop.f32.mrf.mxu0
    %v504 = vadd.f32 0.0, %v503
    %505 = vmatmul.f32.gmra.mxu0 %v250
    %v506 = vpop.f32.mrf.mxu0
    %v507 = vadd.f32 0.0, %v506
    %508 = vmatmul.f32.gmra.mxu0 %v253
    %v509 = vpop.f32.mrf.mxu0
    %v510 = vadd.f32 0.0, %v509
    %511 = vmatmul.f32.gmra.mxu0 %v256
    %v512 = vpop.f32.mrf.mxu0
    %v513 = vadd.f32 0.0, %v512
    %514 = vmatmul.f32.gmra.mxu0 %v259
    %v515 = vpop.f32.mrf.mxu0
    %v516 = vadd.f32 0.0, %v515
    %517 = vmatmul.f32.gmra.mxu0 %v262
    %v518 = vpop.f32.mrf.mxu0
    %v519 = vadd.f32 0.0, %v518
    %520 = vmatmul.f32.gmra.mxu0 %v265
    %v521 = vpop.f32.mrf.mxu0
    %v522 = vadd.f32 0.0, %v521
    %523 = vmatmul.f32.gmra.mxu0 %v268
    %v524 = vpop.f32.mrf.mxu0
    %v525 = vadd.f32 0.0, %v524
    %526 = vmatmul.f32.gmra.mxu0 %v271
    %v527 = vpop.f32.mrf.mxu0
    %v528 = vadd.f32 0.0, %v527
    %529 = vmatmul.f32.gmra.mxu0 %v274
    %v530 = vpop.f32.mrf.mxu0
    %v531 = vadd.f32 0.0, %v530
    %532 = vmatmul.f32.gmra.mxu0 %v277
    %v533 = vpop.f32.mrf.mxu0
    %v534 = vadd.f32 0.0, %v533
    %535 = vdwg.mxu0
    %536 = vmatpush.msra.mxu0 0.0
    %537 = vmatpush.msra.mxu0 0.0
    %538 = vmatpush.msra.mxu0 0.0
    %539 = vmatpush.msra.mxu0 0.0
    %540 = vmatpush.msra.mxu0 0.0
    %541 = vmatpush.msra.mxu0 0.0
    %542 = vmatpush.msra.mxu0 0.0
    %543 = vmatpush.msra.mxu0 0.0
    %544 = vmatpush.msra.mxu0 0.0
    %545 = vmatpush.msra.mxu0 0.0
    %546 = vmatpush.msra.mxu0 0.0
    %547 = vmatpush.msra.mxu0 0.0
    %548 = vmatpush.msra.mxu0 %v226
    %549 = vmatpush.msra.mxu0 %v224
    %550 = vmatpush.msra.mxu0 %v222
    %551 = vmatpush.msra.mxu0 %v220
    %552 = vmatmul.f32.gmra.mxu0 %v244
    %v553 = vpop.f32.mrf.mxu0
    %v554 = vadd.f32 0.0, %v553
    %555 = vmatmul.f32.gmra.mxu0 %v247
    %v556 = vpop.f32.mrf.mxu0
    %v557 = vadd.f32 0.0, %v556
    %558 = vmatmul.f32.gmra.mxu0 %v250
    %v559 = vpop.f32.mrf.mxu0
    %v560 = vadd.f32 0.0, %v559
    %561 = vmatmul.f32.gmra.mxu0 %v253
    %v562 = vpop.f32.mrf.mxu0
    %v563 = vadd.f32 0.0, %v562
    %564 = vmatmul.f32.gmra.mxu0 %v256
    %v565 = vpop.f32.mrf.mxu0
    %v566 = vadd.f32 0.0, %v565
    %567 = vmatmul.f32.gmra.mxu0 %v259
    %v568 = vpop.f32.mrf.mxu0
    %v569 = vadd.f32 0.0, %v568
    %570 = vmatmul.f32.gmra.mxu0 %v262
    %v571 = vpop.f32.mrf.mxu0
    %v572 = vadd.f32 0.0, %v571
    %573 = vmatmul.f32.gmra.mxu0 %v265
    %v574 = vpop.f32.mrf.mxu0
    %v575 = vadd.f32 0.0, %v574
    %576 = vmatmul.f32.gmra.mxu0 %v268
    %v577 = vpop.f32.mrf.mxu0
    %v578 = vadd.f32 0.0, %v577
    %579 = vmatmul.f32.gmra.mxu0 %v271
    %v580 = vpop.f32.mrf.mxu0
    %v581 = vadd.f32 0.0, %v580
    %582 = vmatmul.f32.gmra.mxu0 %v274
    %v583 = vpop.f32.mrf.mxu0
    %v584 = vadd.f32 0.0, %v583
    %585 = vmatmul.f32.gmra.mxu0 %v277
    %v586 = vpop.f32.mrf.mxu0
    %v587 = vadd.f32 0.0, %v586
    %588 = vdwg.mxu0
    %v589 = vmax.f32 %v501, %v507
    %v590 = vmax.f32 %v504, %v510
    %v591 = vmax.f32 %v589, %v590
    %v592 = vrot.slane %v591, 4
    %v593 = vmax.f32 %v591, %v592
    %v594 = vrot.slane %v593, 2
    %v595 = vmax.f32 %v593, %v594
    %v596 = vrot.slane %v595, 1
    %v597 = vmax.f32 %v595, %v596
    %v598 = vmax.f32 %v554, %v560
    %v599 = vmax.f32 %v557, %v563
    %v600 = vmax.f32 %v598, %v599
    %v601 = vrot.slane %v600, 4
    %v602 = vmax.f32 %v600, %v601
    %v603 = vrot.slane %v602, 2
    %v604 = vmax.f32 %v602, %v603
    %v605 = vrot.slane %v604, 1
    %v606 = vmax.f32 %v604, %v605
    %v607 = vsub.f32 %v501, %v597
    %v608 = vsub.f32 %v554, %v606
    %v609 = vsub.f32 %v504, %v597
    %v610 = vsub.f32 %v557, %v606
    %v611 = vsub.f32 %v507, %v597
    %v612 = vsub.f32 %v560, %v606
    %v613 = vsub.f32 %v510, %v597
    %v614 = vsub.f32 %v563, %v606
    %v615 = vmul.f32 %v607, 1.442695
    %v616 = vpow.pop %v615
    %v617 = vmul.f32 %v608, 1.442695
    %v618 = vpow.pop %v617
    %v619 = vmul.f32 %v609, 1.442695
    %v620 = vpow.pop %v619
    %v621 = vmul.f32 %v610, 1.442695
    %v622 = vpow.pop %v621
    %v623 = vmul.f32 %v611, 1.442695
    %v624 = vpow.pop %v623
    %v625 = vmul.f32 %v612, 1.442695
    %v626 = vpow.pop %v625
    %v627 = vmul.f32 %v613, 1.442695
    %v628 = vpow.pop %v627
    %v629 = vmul.f32 %v614, 1.442695
    %v630 = vpow.pop %v629
    %v631 = vadd.f32 %v616, %v620
    %v632 = vadd.f32 %v631, %v624
    %v633 = vadd.f32 %v632, %v628
    %v634 = vrot.slane %v633, 4
    %v635 = vadd.f32 %v633, %v634
    %v636 = vrot.slane %v635, 2
    %v637 = vadd.f32 %v635, %v636
    %v638 = vrot.slane %v637, 1
    %v639 = vadd.f32 %v637, %v638
    %v640 = vadd.f32 %v618, %v622
    %v641 = vadd.f32 %v640, %v626
    %v642 = vadd.f32 %v641, %v630
    %v643 = vrot.slane %v642, 4
    %v644 = vadd.f32 %v642, %v643
    %v645 = vrot.slane %v644, 2
    %v646 = vadd.f32 %v644, %v645
    %v647 = vrot.slane %v646, 1
    %v648 = vadd.f32 %v646, %v647
    %v649 = vrcp.pop %v639
    %v650 = vmul.f32 %v639, %v649
    %v651 = vsub.f32 1.0, %v650
    %v652 = vmul.f32 %v649, %v651
    %v653 = vadd.f32 %v649, %v652
    %vm654 = vweird.f32 %v639
    %vm655 = vweird.f32 %v649
    %vm656 = vmor %vm654, %vm655
    %v657 = vsel %vm656, %v649, %v653
    %v658 = vand.u32 2147483647, %v639
    %vm659 = vcmp.eq.f32.partialorder %v658, 8.507059e+37
    %v660 = vand.u32 %v639, 2147483648
    %v661 = vor.u32 1.1754944e-38, %v660
    %v662 = vsel %vm659, %v661, %v657
    %v663 = vmul.f32 0.17677669, %v662
    %v664 = vrcp.pop %v648
    %v665 = vmul.f32 %v648, %v664
    %v666 = vsub.f32 1.0, %v665
    %v667 = vmul.f32 %v664, %v666
    %v668 = vadd.f32 %v664, %v667
    %vm669 = vweird.f32 %v648
    %vm670 = vweird.f32 %v664
    %vm671 = vmor %vm669, %vm670
    %v672 = vsel %vm671, %v664, %v668
    %v673 = vand.u32 2147483647, %v648
    %vm674 = vcmp.eq.f32.partialorder %v673, 8.507059e+37
    %v675 = vand.u32 %v648, 2147483648
    %v676 = vor.u32 1.1754944e-38, %v675
    %v677 = vsel %vm674, %v676, %v672
    %v678 = vmul.f32 0.17677669, %v677
    %v679 = vmul.f32 %v616, %v663
    %v680 = vmul.f32 %v618, %v678
    %v681 = vmul.f32 %v620, %v663
    %v682 = vmul.f32 %v622, %v678
    %v683 = vmul.f32 %v624, %v663
    %v684 = vmul.f32 %v626, %v678
    %v685 = vmul.f32 %v628, %v663
    %v686 = vmul.f32 %v630, %v678
    %v687 = vmax.f32 %v309, %v513
    %v688 = vmax.f32 %v362, %v566
    %v689 = vmax.f32 %v312, %v516
    %v690 = vmax.f32 %v365, %v569
    %v691 = vmax.f32 %v315, %v519
    %v692 = vmax.f32 %v368, %v572
    %v693 = vmax.f32 %v318, %v522
    %v694 = vmax.f32 %v371, %v575
    %v695 = vsub.f32 %v309, %v687
    %v696 = vsub.f32 %v362, %v688
    %v697 = vsub.f32 %v312, %v689
    %v698 = vsub.f32 %v365, %v690
    %v699 = vsub.f32 %v315, %v691
    %v700 = vsub.f32 %v368, %v692
    %v701 = vsub.f32 %v318, %v693
    %v702 = vsub.f32 %v371, %v694
    %v703 = vmul.f32 %v695, 1.442695
    %v704 = vpow.pop %v703
    %v705 = vmul.f32 %v696, 1.442695
    %v706 = vpow.pop %v705
    %v707 = vmul.f32 %v697, 1.442695
    %v708 = vpow.pop %v707
    %v709 = vmul.f32 %v698, 1.442695
    %v710 = vpow.pop %v709
    %v711 = vmul.f32 %v699, 1.442695
    %v712 = vpow.pop %v711
    %v713 = vmul.f32 %v700, 1.442695
    %v714 = vpow.pop %v713
    %v715 = vmul.f32 %v701, 1.442695
    %v716 = vpow.pop %v715
    %v717 = vmul.f32 %v702, 1.442695
    %v718 = vpow.pop %v717
    %v719 = vsub.f32 %v513, %v687
    %v720 = vsub.f32 %v566, %v688
    %v721 = vsub.f32 %v516, %v689
    %v722 = vsub.f32 %v569, %v690
    %v723 = vsub.f32 %v519, %v691
    %v724 = vsub.f32 %v572, %v692
    %v725 = vsub.f32 %v522, %v693
    %v726 = vsub.f32 %v575, %v694
    %v727 = vmul.f32 %v719, 1.442695
    %v728 = vpow.pop %v727
    %v729 = vmul.f32 %v720, 1.442695
    %v730 = vpow.pop %v729
    %v731 = vmul.f32 %v721, 1.442695
    %v732 = vpow.pop %v731
    %v733 = vmul.f32 %v722, 1.442695
    %v734 = vpow.pop %v733
    %v735 = vmul.f32 %v723, 1.442695
    %v736 = vpow.pop %v735
    %v737 = vmul.f32 %v724, 1.442695
    %v738 = vpow.pop %v737
    %v739 = vmul.f32 %v725, 1.442695
    %v740 = vpow.pop %v739
    %v741 = vmul.f32 %v726, 1.442695
    %v742 = vpow.pop %v741
    %v743 = vadd.f32 %v704, %v728
    %v744 = vadd.f32 %v706, %v730
    %v745 = vadd.f32 %v708, %v732
    %v746 = vadd.f32 %v710, %v734
    %v747 = vadd.f32 %v712, %v736
    %v748 = vadd.f32 %v714, %v738
    %v749 = vadd.f32 %v716, %v740
    %v750 = vadd.f32 %v718, %v742
    %v751 = vrcp.pop %v743
    %v752 = vmul.f32 %v743, %v751
    %v753 = vsub.f32 1.0, %v752
    %v754 = vmul.f32 %v751, %v753
    %v755 = vadd.f32 %v751, %v754
    %vm756 = vweird.f32 %v743
    %vm757 = vweird.f32 %v751
    %vm758 = vmor %vm756, %vm757
    %v759 = vsel %vm758, %v751, %v755
    %v760 = vand.u32 2147483647, %v743
    %vm761 = vcmp.eq.f32.partialorder %v760, 8.507059e+37
    %v762 = vand.u32 %v743, 2147483648
    %v763 = vor.u32 1.1754944e-38, %v762
    %v764 = vsel %vm761, %v763, %v759
    %v765 = vmul.f32 1.0, %v764
    %v766 = vrcp.pop %v744
    %v767 = vmul.f32 %v744, %v766
    %v768 = vsub.f32 1.0, %v767
    %v769 = vmul.f32 %v766, %v768
    %v770 = vadd.f32 %v766, %v769
    %vm771 = vweird.f32 %v744
    %vm772 = vweird.f32 %v766
    %vm773 = vmor %vm771, %vm772
    %v774 = vsel %vm773, %v766, %v770
    %v775 = vand.u32 2147483647, %v744
    %vm776 = vcmp.eq.f32.partialorder %v775, 8.507059e+37
    %v777 = vand.u32 %v744, 2147483648
    %v778 = vor.u32 1.1754944e-38, %v777
    %v779 = vsel %vm776, %v778, %v774
    %v780 = vmul.f32 1.0, %v779
    %v781 = vrcp.pop %v745
    %v782 = vmul.f32 %v745, %v781
    %v783 = vsub.f32 1.0, %v782
    %v784 = vmul.f32 %v781, %v783
    %v785 = vadd.f32 %v781, %v784
    %vm786 = vweird.f32 %v745
    %vm787 = vweird.f32 %v781
    %vm788 = vmor %vm786, %vm787
    %v789 = vsel %vm788, %v781, %v785
    %v790 = vand.u32 2147483647, %v745
    %vm791 = vcmp.eq.f32.partialorder %v790, 8.507059e+37
    %v792 = vand.u32 %v745, 2147483648
    %v793 = vor.u32 1.1754944e-38, %v792
    %v794 = vsel %vm791, %v793, %v789
    %v795 = vmul.f32 1.0, %v794
    %v796 = vrcp.pop %v746
    %v797 = vmul.f32 %v746, %v796
    %v798 = vsub.f32 1.0, %v797
    %v799 = vmul.f32 %v796, %v798
    %v800 = vadd.f32 %v796, %v799
    %vm801 = vweird.f32 %v746
    %vm802 = vweird.f32 %v796
    %vm803 = vmor %vm801, %vm802
    %v804 = vsel %vm803, %v796, %v800
    %v805 = vand.u32 2147483647, %v746
    %vm806 = vcmp.eq.f32.partialorder %v805, 8.507059e+37
    %v807 = vand.u32 %v746, 2147483648
    %v808 = vor.u32 1.1754944e-38, %v807
    %v809 = vsel %vm806, %v808, %v804
    %v810 = vmul.f32 1.0, %v809
    %v811 = vrcp.pop %v747
    %v812 = vmul.f32 %v747, %v811
    %v813 = vsub.f32 1.0, %v812
    %v814 = vmul.f32 %v811, %v813
    %v815 = vadd.f32 %v811, %v814
    %vm816 = vweird.f32 %v747
    %vm817 = vweird.f32 %v811
    %vm818 = vmor %vm816, %vm817
    %v819 = vsel %vm818, %v811, %v815
    %v820 = vand.u32 2147483647, %v747
    %vm821 = vcmp.eq.f32.partialorder %v820, 8.507059e+37
    %v822 = vand.u32 %v747, 2147483648
    %v823 = vor.u32 1.1754944e-38, %v822
    %v824 = vsel %vm821, %v823, %v819
    %v825 = vmul.f32 1.0, %v824
    %v826 = vrcp.pop %v748
    %v827 = vmul.f32 %v748, %v826
    %v828 = vsub.f32 1.0, %v827
    %v829 = vmul.f32 %v826, %v828
    %v830 = vadd.f32 %v826, %v829
    %vm831 = vweird.f32 %v748
    %vm832 = vweird.f32 %v826
    %vm833 = vmor %vm831, %vm832
    %v834 = vsel %vm833, %v826, %v830
    %v835 = vand.u32 2147483647, %v748
    %vm836 = vcmp.eq.f32.partialorder %v835, 8.507059e+37
    %v837 = vand.u32 %v748, 2147483648
    %v838 = vor.u32 1.1754944e-38, %v837
    %v839 = vsel %vm836, %v838, %v834
    %v840 = vmul.f32 1.0, %v839
    %v841 = vrcp.pop %v749
    %v842 = vmul.f32 %v749, %v841
    %v843 = vsub.f32 1.0, %v842
    %v844 = vmul.f32 %v841, %v843
    %v845 = vadd.f32 %v841, %v844
    %vm846 = vweird.f32 %v749
    %vm847 = vweird.f32 %v841
    %vm848 = vmor %vm846, %vm847
    %v849 = vsel %vm848, %v841, %v845
    %v850 = vand.u32 2147483647, %v749
    %vm851 = vcmp.eq.f32.partialorder %v850, 8.507059e+37
    %v852 = vand.u32 %v749, 2147483648
    %v853 = vor.u32 1.1754944e-38, %v852
    %v854 = vsel %vm851, %v853, %v849
    %v855 = vmul.f32 1.0, %v854
    %v856 = vrcp.pop %v750
    %v857 = vmul.f32 %v750, %v856
    %v858 = vsub.f32 1.0, %v857
    %v859 = vmul.f32 %v856, %v858
    %v860 = vadd.f32 %v856, %v859
    %vm861 = vweird.f32 %v750
    %vm862 = vweird.f32 %v856
    %vm863 = vmor %vm861, %vm862
    %v864 = vsel %vm863, %v856, %v860
    %v865 = vand.u32 2147483647, %v750
    %vm866 = vcmp.eq.f32.partialorder %v865, 8.507059e+37
    %v867 = vand.u32 %v750, 2147483648
    %v868 = vor.u32 1.1754944e-38, %v867
    %v869 = vsel %vm866, %v868, %v864
    %v870 = vmul.f32 1.0, %v869
    %v871 = vmul.f32 %v704, %v765
    %v872 = vmul.f32 %v706, %v780
    %v873 = vmul.f32 %v708, %v795
    %v874 = vmul.f32 %v710, %v810
    %v875 = vmul.f32 %v712, %v825
    %v876 = vmul.f32 %v714, %v840
    %v877 = vmul.f32 %v716, %v855
    %v878 = vmul.f32 %v718, %v870
    %v879 = vmul.f32 %v728, %v765
    %v880 = vmul.f32 %v730, %v780
    %v881 = vmul.f32 %v732, %v795
    %v882 = vmul.f32 %v734, %v810
    %v883 = vmul.f32 %v736, %v825
    %v884 = vmul.f32 %v738, %v840
    %v885 = vmul.f32 %v740, %v855
    %v886 = vmul.f32 %v742, %v870
    %v887 = vmul.f32 %v475, %v871
    %v888 = vmul.f32 %v476, %v872
    %v889 = vmul.f32 %v477, %v873
    %v890 = vmul.f32 %v478, %v874
    %v891 = vmul.f32 %v479, %v875
    %v892 = vmul.f32 %v480, %v876
    %v893 = vmul.f32 %v481, %v877
    %v894 = vmul.f32 %v482, %v878
    %v895 = vadd.f32 %v887, %v889
    %v896 = vadd.f32 %v895, %v891
    %v897 = vadd.f32 %v896, %v893
    %v898 = vrot.slane %v897, 4
    %v899 = vadd.f32 %v897, %v898
    %v900 = vrot.slane %v899, 2
    %v901 = vadd.f32 %v899, %v900
    %v902 = vrot.slane %v901, 1
    %v903 = vadd.f32 %v901, %v902
    %v904 = vadd.f32 %v888, %v890
    %v905 = vadd.f32 %v904, %v892
    %v906 = vadd.f32 %v905, %v894
    %v907 = vrot.slane %v906, 4
    %v908 = vadd.f32 %v906, %v907
    %v909 = vrot.slane %v908, 2
    %v910 = vadd.f32 %v908, %v909
    %v911 = vrot.slane %v910, 1
    %v912 = vadd.f32 %v910, %v911
    %v913 = vmul.f32 %v903, %v321
    %v914 = vmul.f32 %v912, %v374
    %v915 = vmul.f32 %v903, %v324
    %v916 = vmul.f32 %v912, %v377
    %v917 = vmul.f32 %v903, %v327
    %v918 = vmul.f32 %v912, %v380
    %v919 = vmul.f32 %v903, %v330
    %v920 = vmul.f32 %v912, %v383
    %v921 = vmul.f32 %v475, %v879
    %v922 = vmul.f32 %v476, %v880
    %v923 = vmul.f32 %v477, %v881
    %v924 = vmul.f32 %v478, %v882
    %v925 = vmul.f32 %v479, %v883
    %v926 = vmul.f32 %v480, %v884
    %v927 = vmul.f32 %v481, %v885
    %v928 = vmul.f32 %v482, %v886
    %v929 = vadd.f32 %v921, %v923
    %v930 = vadd.f32 %v929, %v925
    %v931 = vadd.f32 %v930, %v927
    %v932 = vrot.slane %v931, 4
    %v933 = vadd.f32 %v931, %v932
    %v934 = vrot.slane %v933, 2
    %v935 = vadd.f32 %v933, %v934
    %v936 = vrot.slane %v935, 1
    %v937 = vadd.f32 %v935, %v936
    %v938 = vadd.f32 %v922, %v924
    %v939 = vadd.f32 %v938, %v926
    %v940 = vadd.f32 %v939, %v928
    %v941 = vrot.slane %v940, 4
    %v942 = vadd.f32 %v940, %v941
    %v943 = vrot.slane %v942, 2
    %v944 = vadd.f32 %v942, %v943
    %v945 = vrot.slane %v944, 1
    %v946 = vadd.f32 %v944, %v945
    %v947 = vmul.f32 %v937, %v525
    %v948 = vmul.f32 %v946, %v578
    %v949 = vmul.f32 %v937, %v528
    %v950 = vmul.f32 %v946, %v581
    %v951 = vmul.f32 %v937, %v531
    %v952 = vmul.f32 %v946, %v584
    %v953 = vmul.f32 %v937, %v534
    %v954 = vmul.f32 %v946, %v587
    %v955 = vadd.f32 %v913, %v947
    %v956 = vadd.f32 %v914, %v948
    %v957 = vadd.f32 %v915, %v949
    %v958 = vadd.f32 %v916, %v950
    %v959 = vadd.f32 %v917, %v951
    %v960 = vadd.f32 %v918, %v952
    %v961 = vadd.f32 %v919, %v953
    %v962 = vadd.f32 %v920, %v954
    %v963 = vadd.f32 %v136, %v955
    %v964 = vadd.f32 %v137, %v956
    %v965 = vadd.f32 %v138, %v957
    %v966 = vadd.f32 %v139, %v958
    %v967 = vadd.f32 %v140, %v959
    %v968 = vadd.f32 %v141, %v960
    %v969 = vadd.f32 %v142, %v961
    %v970 = vadd.f32 %v143, %v962
    %v972 = vsel %vm65, %v239, 0
    %v975 = vsel %vm65, %v240, 0
    %v978 = vsel %vm65, %v241, 0
    %v981 = vsel %vm65, %v242, 0
    %983 = vmatpush.msra.mxu0 0.0
    %984 = vmatpush.msra.mxu0 0.0
    %985 = vmatpush.msra.mxu0 0.0
    %986 = vmatpush.msra.mxu0 0.0
    %987 = vmatpush.msra.mxu0 0.0
    %988 = vmatpush.msra.mxu0 0.0
    %989 = vmatpush.msra.mxu0 0.0
    %990 = vmatpush.msra.mxu0 0.0
    %991 = vmatpush.msra.mxu0 0.0
    %992 = vmatpush.msra.mxu0 0.0
    %993 = vmatpush.msra.mxu0 0.0
    %994 = vmatpush.msra.mxu0 0.0
    %995 = vmatpush.msra.mxu0 %v969
    %996 = vmatpush.msra.mxu0 %v967
    %997 = vmatpush.msra.mxu0 %v965
    %998 = vmatpush.msra.mxu0 %v963
    %999 = vmatmul.f32.gmra.mxu0 %v972
    %v1000 = vpop.f32.mrf.mxu0
    %v1001 = vadd.f32 0.0, %v1000
    %1002 = vmatmul.f32.gmra.mxu0 %v975
    %v1003 = vpop.f32.mrf.mxu0
    %v1004 = vadd.f32 0.0, %v1003
    %1005 = vmatmul.f32.gmra.mxu0 %v978
    %v1006 = vpop.f32.mrf.mxu0
    %v1007 = vadd.f32 0.0, %v1006
    %1008 = vmatmul.f32.gmra.mxu0 %v981
    %v1009 = vpop.f32.mrf.mxu0
    %v1010 = vadd.f32 0.0, %v1009
    %1011 = vdwg.mxu0
    %1012 = vmatpush.msra.mxu0 0.0
    %1013 = vmatpush.msra.mxu0 0.0
    %1014 = vmatpush.msra.mxu0 0.0
    %1015 = vmatpush.msra.mxu0 0.0
    %1016 = vmatpush.msra.mxu0 0.0
    %1017 = vmatpush.msra.mxu0 0.0
    %1018 = vmatpush.msra.mxu0 0.0
    %1019 = vmatpush.msra.mxu0 0.0
    %1020 = vmatpush.msra.mxu0 0.0
    %1021 = vmatpush.msra.mxu0 0.0
    %1022 = vmatpush.msra.mxu0 0.0
    %1023 = vmatpush.msra.mxu0 0.0
    %1024 = vmatpush.msra.mxu0 %v970
    %1025 = vmatpush.msra.mxu0 %v968
    %1026 = vmatpush.msra.mxu0 %v966
    %1027 = vmatpush.msra.mxu0 %v964
    %1028 = vmatmul.f32.gmra.mxu0 %v972
    %v1029 = vpop.f32.mrf.mxu0
    %v1030 = vadd.f32 0.0, %v1029
    %1031 = vmatmul.f32.gmra.mxu0 %v975
    %v1032 = vpop.f32.mrf.mxu0
    %v1033 = vadd.f32 0.0, %v1032
    %1034 = vmatmul.f32.gmra.mxu0 %v978
    %v1035 = vpop.f32.mrf.mxu0
    %v1036 = vadd.f32 0.0, %v1035
    %1037 = vmatmul.f32.gmra.mxu0 %v981
    %v1038 = vpop.f32.mrf.mxu0
    %v1039 = vadd.f32 0.0, %v1038
    %1040 = vdwg.mxu0
    %v1041 = vadd.f32 %v963, %v1001
    %v1042 = vadd.f32 %v964, %v1030
    %v1043 = vadd.f32 %v965, %v1004
    %v1044 = vadd.f32 %v966, %v1033
    %v1045 = vadd.f32 %v967, %v1007
    %v1046 = vadd.f32 %v968, %v1036
    %v1047 = vadd.f32 %v969, %v1010
    %v1048 = vadd.f32 %v970, %v1039
    %v1049 = vmul.f32 %v679, %v871
    %v1050 = vmul.f32 %v680, %v872
    %v1051 = vmul.f32 %v681, %v873
    %v1052 = vmul.f32 %v682, %v874
    %v1053 = vmul.f32 %v683, %v875
    %v1054 = vmul.f32 %v684, %v876
    %v1055 = vmul.f32 %v685, %v877
    %v1056 = vmul.f32 %v686, %v878
    %v1057 = vadd.f32 %v1049, %v1051
    %v1058 = vadd.f32 %v1057, %v1053
    %v1059 = vadd.f32 %v1058, %v1055
    %v1060 = vrot.slane %v1059, 4
    %v1061 = vadd.f32 %v1059, %v1060
    %v1062 = vrot.slane %v1061, 2
    %v1063 = vadd.f32 %v1061, %v1062
    %v1064 = vrot.slane %v1063, 1
    %v1065 = vadd.f32 %v1063, %v1064
    %v1066 = vadd.f32 %v1050, %v1052
    %v1067 = vadd.f32 %v1066, %v1054
    %v1068 = vadd.f32 %v1067, %v1056
    %v1069 = vrot.slane %v1068, 4
    %v1070 = vadd.f32 %v1068, %v1069
    %v1071 = vrot.slane %v1070, 2
    %v1072 = vadd.f32 %v1070, %v1071
    %v1073 = vrot.slane %v1072, 1
    %v1074 = vadd.f32 %v1072, %v1073
    %v1075 = vmul.f32 %v1065, %v321
    %v1076 = vmul.f32 %v1074, %v374
    %v1077 = vmul.f32 %v1065, %v324
    %v1078 = vmul.f32 %v1074, %v377
    %v1079 = vmul.f32 %v1065, %v327
    %v1080 = vmul.f32 %v1074, %v380
    %v1081 = vmul.f32 %v1065, %v330
    %v1082 = vmul.f32 %v1074, %v383
    %v1083 = vmul.f32 %v679, %v879
    %v1084 = vmul.f32 %v680, %v880
    %v1085 = vmul.f32 %v681, %v881
    %v1086 = vmul.f32 %v682, %v882
    %v1087 = vmul.f32 %v683, %v883
    %v1088 = vmul.f32 %v684, %v884
    %v1089 = vmul.f32 %v685, %v885
    %v1090 = vmul.f32 %v686, %v886
    %v1091 = vadd.f32 %v1083, %v1085
    %v1092 = vadd.f32 %v1091, %v1087
    %v1093 = vadd.f32 %v1092, %v1089
    %v1094 = vrot.slane %v1093, 4
    %v1095 = vadd.f32 %v1093, %v1094
    %v1096 = vrot.slane %v1095, 2
    %v1097 = vadd.f32 %v1095, %v1096
    %v1098 = vrot.slane %v1097, 1
    %v1099 = vadd.f32 %v1097, %v1098
    %v1100 = vadd.f32 %v1084, %v1086
    %v1101 = vadd.f32 %v1100, %v1088
    %v1102 = vadd.f32 %v1101, %v1090
    %v1103 = vrot.slane %v1102, 4
    %v1104 = vadd.f32 %v1102, %v1103
    %v1105 = vrot.slane %v1104, 2
    %v1106 = vadd.f32 %v1104, %v1105
    %v1107 = vrot.slane %v1106, 1
    %v1108 = vadd.f32 %v1106, %v1107
    %v1109 = vmul.f32 %v1099, %v525
    %v1110 = vmul.f32 %v1108, %v578
    %v1111 = vmul.f32 %v1099, %v528
    %v1112 = vmul.f32 %v1108, %v581
    %v1113 = vmul.f32 %v1099, %v531
    %v1114 = vmul.f32 %v1108, %v584
    %v1115 = vmul.f32 %v1099, %v534
    %v1116 = vmul.f32 %v1108, %v587
    %v1117 = vadd.f32 %v1075, %v1109
    %v1118 = vadd.f32 %v1076, %v1110
    %v1119 = vadd.f32 %v1077, %v1111
    %v1120 = vadd.f32 %v1078, %v1112
    %v1121 = vadd.f32 %v1079, %v1113
    %v1122 = vadd.f32 %v1080, %v1114
    %v1123 = vadd.f32 %v1081, %v1115
    %v1124 = vadd.f32 %v1082, %v1116
    %v1125 = vadd.f32 %v219, %v1117
    %v1126 = vadd.f32 %v220, %v1118
    %v1127 = vadd.f32 %v221, %v1119
    %v1128 = vadd.f32 %v222, %v1120
    %v1129 = vadd.f32 %v223, %v1121
    %v1130 = vadd.f32 %v224, %v1122
    %v1131 = vadd.f32 %v225, %v1123
    %v1132 = vadd.f32 %v226, %v1124
    %1133 = vmatpush.msra.mxu0 0.0
    %1134 = vmatpush.msra.mxu0 0.0
    %1135 = vmatpush.msra.mxu0 0.0
    %1136 = vmatpush.msra.mxu0 0.0
    %1137 = vmatpush.msra.mxu0 0.0
    %1138 = vmatpush.msra.mxu0 0.0
    %1139 = vmatpush.msra.mxu0 0.0
    %1140 = vmatpush.msra.mxu0 0.0
    %1141 = vmatpush.msra.mxu0 0.0
    %1142 = vmatpush.msra.mxu0 0.0
    %1143 = vmatpush.msra.mxu0 0.0
    %1144 = vmatpush.msra.mxu0 0.0
    %1145 = vmatpush.msra.mxu0 %v1131
    %1146 = vmatpush.msra.mxu0 %v1129
    %1147 = vmatpush.msra.mxu0 %v1127
    %1148 = vmatpush.msra.mxu0 %v1125
    %1149 = vmatmul.f32.gmra.mxu0 %v972
    %v1150 = vpop.f32.mrf.mxu0
    %v1151 = vadd.f32 0.0, %v1150
    %1152 = vmatmul.f32.gmra.mxu0 %v975
    %v1153 = vpop.f32.mrf.mxu0
    %v1154 = vadd.f32 0.0, %v1153
    %1155 = vmatmul.f32.gmra.mxu0 %v978
    %v1156 = vpop.f32.mrf.mxu0
    %v1157 = vadd.f32 0.0, %v1156
    %1158 = vmatmul.f32.gmra.mxu0 %v981
    %v1159 = vpop.f32.mrf.mxu0
    %v1160 = vadd.f32 0.0, %v1159
    %1161 = vdwg.mxu0
    %1162 = vmatpush.msra.mxu0 0.0
    %1163 = vmatpush.msra.mxu0 0.0
    %1164 = vmatpush.msra.mxu0 0.0
    %1165 = vmatpush.msra.mxu0 0.0
    %1166 = vmatpush.msra.mxu0 0.0
    %1167 = vmatpush.msra.mxu0 0.0
    %1168 = vmatpush.msra.mxu0 0.0
    %1169 = vmatpush.msra.mxu0 0.0
    %1170 = vmatpush.msra.mxu0 0.0
    %1171 = vmatpush.msra.mxu0 0.0
    %1172 = vmatpush.msra.mxu0 0.0
    %1173 = vmatpush.msra.mxu0 0.0
    %1174 = vmatpush.msra.mxu0 %v1132
    %1175 = vmatpush.msra.mxu0 %v1130
    %1176 = vmatpush.msra.mxu0 %v1128
    %1177 = vmatpush.msra.mxu0 %v1126
    %1178 = vmatmul.f32.gmra.mxu0 %v972
    %v1179 = vpop.f32.mrf.mxu0
    %v1180 = vadd.f32 0.0, %v1179
    %1181 = vmatmul.f32.gmra.mxu0 %v975
    %v1182 = vpop.f32.mrf.mxu0
    %v1183 = vadd.f32 0.0, %v1182
    %1184 = vmatmul.f32.gmra.mxu0 %v978
    %v1185 = vpop.f32.mrf.mxu0
    %v1186 = vadd.f32 0.0, %v1185
    %1187 = vmatmul.f32.gmra.mxu0 %v981
    %v1188 = vpop.f32.mrf.mxu0
    %v1189 = vadd.f32 0.0, %v1188
    %1190 = vdwg.mxu0
    %v1191 = vadd.f32 %v1125, %v1151
    %v1192 = vadd.f32 %v1126, %v1180
    %v1193 = vadd.f32 %v1127, %v1154
    %v1194 = vadd.f32 %v1128, %v1183
    %v1195 = vadd.f32 %v1129, %v1157
    %v1196 = vadd.f32 %v1130, %v1186
    %v1197 = vadd.f32 %v1131, %v1160
    %v1198 = vadd.f32 %v1132, %v1189
    %s1199 = scalar_lea.vmem %s3, 96
    %v1200 = vld [vmem:[%s1199] sm:$0xff]
    %v1201 = vld [vmem:[%s1199 + $0x8] sm:$0xff]
    %v1202 = vld [vmem:[%s1199 + $0x10] sm:$0xff]
    %v1203 = vld [vmem:[%s1199 + $0x18] sm:$0xff]
    %v1204 = vld [vmem:[%s1199 + $0x20] sm:$0xff]
    %v1205 = vld [vmem:[%s1199 + $0x28] sm:$0xff]
    %v1206 = vld [vmem:[%s1199 + $0x30] sm:$0xff]
    %v1207 = vld [vmem:[%s1199 + $0x38] sm:$0xff]
    %v1208 = vld [vmem:[%s1199 + $0x40] sm:$0xff]
    %v1209 = vld [vmem:[%s1199 + $0x48] sm:$0xff]
    %v1210 = vld [vmem:[%s1199 + $0x50] sm:$0xff]
    %v1211 = vld [vmem:[%s1199 + $0x58] sm:$0xff]
    %s1212 = scalar_lea.vmem %s4, 32
    %v1213 = vld [vmem:[%s1212] sm:$0xff]
    %v1214 = vld [vmem:[%s1212 + $0x8] sm:$0xff]
    %v1215 = vld [vmem:[%s1212 + $0x10] sm:$0xff]
    %v1216 = vld [vmem:[%s1212 + $0x18] sm:$0xff]
    %v1218 = vsel %vm65, %v1200, 0
    %v1221 = vsel %vm65, %v1201, 0
    %v1224 = vsel %vm65, %v1202, 0
    %v1227 = vsel %vm65, %v1203, 0
    %v1230 = vsel %vm65, %v1204, 0
    %v1233 = vsel %vm65, %v1205, 0
    %v1236 = vsel %vm65, %v1206, 0
    %v1239 = vsel %vm65, %v1207, 0
    %v1242 = vsel %vm65, %v1208, 0
    %v1245 = vsel %vm65, %v1209, 0
    %v1248 = vsel %vm65, %v1210, 0
    %v1251 = vsel %vm65, %v1211, 0
    %1253 = vmatpush.msra.mxu0 0.0
    %1254 = vmatpush.msra.mxu0 0.0
    %1255 = vmatpush.msra.mxu0 0.0
    %1256 = vmatpush.msra.mxu0 0.0
    %1257 = vmatpush.msra.mxu0 0.0
    %1258 = vmatpush.msra.mxu0 0.0
    %1259 = vmatpush.msra.mxu0 0.0
    %1260 = vmatpush.msra.mxu0 0.0
    %1261 = vmatpush.msra.mxu0 0.0
    %1262 = vmatpush.msra.mxu0 0.0
    %1263 = vmatpush.msra.mxu0 0.0
    %1264 = vmatpush.msra.mxu0 0.0
    %1265 = vmatpush.msra.mxu0 %v1047
    %1266 = vmatpush.msra.mxu0 %v1045
    %1267 = vmatpush.msra.mxu0 %v1043
    %1268 = vmatpush.msra.mxu0 %v1041
    %1269 = vmatmul.f32.gmra.mxu0 %v1218
    %v1270 = vpop.f32.mrf.mxu0
    %v1271 = vadd.f32 0.0, %v1270
    %1272 = vmatmul.f32.gmra.mxu0 %v1221
    %v1273 = vpop.f32.mrf.mxu0
    %v1274 = vadd.f32 0.0, %v1273
    %1275 = vmatmul.f32.gmra.mxu0 %v1224
    %v1276 = vpop.f32.mrf.mxu0
    %v1277 = vadd.f32 0.0, %v1276
    %1278 = vmatmul.f32.gmra.mxu0 %v1227
    %v1279 = vpop.f32.mrf.mxu0
    %v1280 = vadd.f32 0.0, %v1279
    %1281 = vmatmul.f32.gmra.mxu0 %v1230
    %v1282 = vpop.f32.mrf.mxu0
    %v1283 = vadd.f32 0.0, %v1282
    %1284 = vmatmul.f32.gmra.mxu0 %v1233
    %v1285 = vpop.f32.mrf.mxu0
    %v1286 = vadd.f32 0.0, %v1285
    %1287 = vmatmul.f32.gmra.mxu0 %v1236
    %v1288 = vpop.f32.mrf.mxu0
    %v1289 = vadd.f32 0.0, %v1288
    %1290 = vmatmul.f32.gmra.mxu0 %v1239
    %v1291 = vpop.f32.mrf.mxu0
    %v1292 = vadd.f32 0.0, %v1291
    %1293 = vmatmul.f32.gmra.mxu0 %v1242
    %v1294 = vpop.f32.mrf.mxu0
    %v1295 = vadd.f32 0.0, %v1294
    %1296 = vmatmul.f32.gmra.mxu0 %v1245
    %v1297 = vpop.f32.mrf.mxu0
    %v1298 = vadd.f32 0.0, %v1297
    %1299 = vmatmul.f32.gmra.mxu0 %v1248
    %v1300 = vpop.f32.mrf.mxu0
    %v1301 = vadd.f32 0.0, %v1300
    %1302 = vmatmul.f32.gmra.mxu0 %v1251
    %v1303 = vpop.f32.mrf.mxu0
    %v1304 = vadd.f32 0.0, %v1303
    %1305 = vdwg.mxu0
    %1306 = vmatpush.msra.mxu0 0.0
    %1307 = vmatpush.msra.mxu0 0.0
    %1308 = vmatpush.msra.mxu0 0.0
    %1309 = vmatpush.msra.mxu0 0.0
    %1310 = vmatpush.msra.mxu0 0.0
    %1311 = vmatpush.msra.mxu0 0.0
    %1312 = vmatpush.msra.mxu0 0.0
    %1313 = vmatpush.msra.mxu0 0.0
    %1314 = vmatpush.msra.mxu0 0.0
    %1315 = vmatpush.msra.mxu0 0.0
    %1316 = vmatpush.msra.mxu0 0.0
    %1317 = vmatpush.msra.mxu0 0.0
    %1318 = vmatpush.msra.mxu0 %v1048
    %1319 = vmatpush.msra.mxu0 %v1046
    %1320 = vmatpush.msra.mxu0 %v1044
    %1321 = vmatpush.msra.mxu0 %v1042
    %1322 = vmatmul.f32.gmra.mxu0 %v1218
    %v1323 = vpop.f32.mrf.mxu0
    %v1324 = vadd.f32 0.0, %v1323
    %1325 = vmatmul.f32.gmra.mxu0 %v1221
    %v1326 = vpop.f32.mrf.mxu0
    %v1327 = vadd.f32 0.0, %v1326
    %1328 = vmatmul.f32.gmra.mxu0 %v1224
    %v1329 = vpop.f32.mrf.mxu0
    %v1330 = vadd.f32 0.0, %v1329
    %1331 = vmatmul.f32.gmra.mxu0 %v1227
    %v1332 = vpop.f32.mrf.mxu0
    %v1333 = vadd.f32 0.0, %v1332
    %1334 = vmatmul.f32.gmra.mxu0 %v1230
    %v1335 = vpop.f32.mrf.mxu0
    %v1336 = vadd.f32 0.0, %v1335
    %1337 = vmatmul.f32.gmra.mxu0 %v1233
    %v1338 = vpop.f32.mrf.mxu0
    %v1339 = vadd.f32 0.0, %v1338
    %1340 = vmatmul.f32.gmra.mxu0 %v1236
    %v1341 = vpop.f32.mrf.mxu0
    %v1342 = vadd.f32 0.0, %v1341
    %1343 = vmatmul.f32.gmra.mxu0 %v1239
    %v1344 = vpop.f32.mrf.mxu0
    %v1345 = vadd.f32 0.0, %v1344
    %1346 = vmatmul.f32.gmra.mxu0 %v1242
    %v1347 = vpop.f32.mrf.mxu0
    %v1348 = vadd.f32 0.0, %v1347
    %1349 = vmatmul.f32.gmra.mxu0 %v1245
    %v1350 = vpop.f32.mrf.mxu0
    %v1351 = vadd.f32 0.0, %v1350
    %1352 = vmatmul.f32.gmra.mxu0 %v1248
    %v1353 = vpop.f32.mrf.mxu0
    %v1354 = vadd.f32 0.0, %v1353
    %1355 = vmatmul.f32.gmra.mxu0 %v1251
    %v1356 = vpop.f32.mrf.mxu0
    %v1357 = vadd.f32 0.0, %v1356
    %1358 = vdwg.mxu0
    %v1359 = vmax.f32 %v1271, %v1277
    %v1360 = vmax.f32 %v1274, %v1280
    %v1361 = vmax.f32 %v1359, %v1360
    %v1362 = vrot.slane %v1361, 4
    %v1363 = vmax.f32 %v1361, %v1362
    %v1364 = vrot.slane %v1363, 2
    %v1365 = vmax.f32 %v1363, %v1364
    %v1366 = vrot.slane %v1365, 1
    %v1367 = vmax.f32 %v1365, %v1366
    %v1368 = vmax.f32 %v1324, %v1330
    %v1369 = vmax.f32 %v1327, %v1333
    %v1370 = vmax.f32 %v1368, %v1369
    %v1371 = vrot.slane %v1370, 4
    %v1372 = vmax.f32 %v1370, %v1371
    %v1373 = vrot.slane %v1372, 2
    %v1374 = vmax.f32 %v1372, %v1373
    %v1375 = vrot.slane %v1374, 1
    %v1376 = vmax.f32 %v1374, %v1375
    %v1377 = vsub.f32 %v1271, %v1367
    %v1378 = vsub.f32 %v1324, %v1376
    %v1379 = vsub.f32 %v1274, %v1367
    %v1380 = vsub.f32 %v1327, %v1376
    %v1381 = vsub.f32 %v1277, %v1367
    %v1382 = vsub.f32 %v1330, %v1376
    %v1383 = vsub.f32 %v1280, %v1367
    %v1384 = vsub.f32 %v1333, %v1376
    %v1385 = vmul.f32 %v1377, 1.442695
    %v1386 = vpow.pop %v1385
    %v1387 = vmul.f32 %v1378, 1.442695
    %v1388 = vpow.pop %v1387
    %v1389 = vmul.f32 %v1379, 1.442695
    %v1390 = vpow.pop %v1389
    %v1391 = vmul.f32 %v1380, 1.442695
    %v1392 = vpow.pop %v1391
    %v1393 = vmul.f32 %v1381, 1.442695
    %v1394 = vpow.pop %v1393
    %v1395 = vmul.f32 %v1382, 1.442695
    %v1396 = vpow.pop %v1395
    %v1397 = vmul.f32 %v1383, 1.442695
    %v1398 = vpow.pop %v1397
    %v1399 = vmul.f32 %v1384, 1.442695
    %v1400 = vpow.pop %v1399
    %v1401 = vadd.f32 %v1386, %v1390
    %v1402 = vadd.f32 %v1401, %v1394
    %v1403 = vadd.f32 %v1402, %v1398
    %v1404 = vrot.slane %v1403, 4
    %v1405 = vadd.f32 %v1403, %v1404
    %v1406 = vrot.slane %v1405, 2
    %v1407 = vadd.f32 %v1405, %v1406
    %v1408 = vrot.slane %v1407, 1
    %v1409 = vadd.f32 %v1407, %v1408
    %v1410 = vadd.f32 %v1388, %v1392
    %v1411 = vadd.f32 %v1410, %v1396
    %v1412 = vadd.f32 %v1411, %v1400
    %v1413 = vrot.slane %v1412, 4
    %v1414 = vadd.f32 %v1412, %v1413
    %v1415 = vrot.slane %v1414, 2
    %v1416 = vadd.f32 %v1414, %v1415
    %v1417 = vrot.slane %v1416, 1
    %v1418 = vadd.f32 %v1416, %v1417
    %v1419 = vrcp.pop %v1409
    %v1420 = vmul.f32 %v1409, %v1419
    %v1421 = vsub.f32 1.0, %v1420
    %v1422 = vmul.f32 %v1419, %v1421
    %v1423 = vadd.f32 %v1419, %v1422
    %vm1424 = vweird.f32 %v1409
    %vm1425 = vweird.f32 %v1419
    %vm1426 = vmor %vm1424, %vm1425
    %v1427 = vsel %vm1426, %v1419, %v1423
    %v1428 = vand.u32 2147483647, %v1409
    %vm1429 = vcmp.eq.f32.partialorder %v1428, 8.507059e+37
    %v1430 = vand.u32 %v1409, 2147483648
    %v1431 = vor.u32 1.1754944e-38, %v1430
    %v1432 = vsel %vm1429, %v1431, %v1427
    %v1433 = vmul.f32 0.17677669, %v1432
    %v1434 = vrcp.pop %v1418
    %v1435 = vmul.f32 %v1418, %v1434
    %v1436 = vsub.f32 1.0, %v1435
    %v1437 = vmul.f32 %v1434, %v1436
    %v1438 = vadd.f32 %v1434, %v1437
    %vm1439 = vweird.f32 %v1418
    %vm1440 = vweird.f32 %v1434
    %vm1441 = vmor %vm1439, %vm1440
    %v1442 = vsel %vm1441, %v1434, %v1438
    %v1443 = vand.u32 2147483647, %v1418
    %vm1444 = vcmp.eq.f32.partialorder %v1443, 8.507059e+37
    %v1445 = vand.u32 %v1418, 2147483648
    %v1446 = vor.u32 1.1754944e-38, %v1445
    %v1447 = vsel %vm1444, %v1446, %v1442
    %v1448 = vmul.f32 0.17677669, %v1447
    %v1449 = vmul.f32 %v1386, %v1433
    %v1450 = vmul.f32 %v1388, %v1448
    %v1451 = vmul.f32 %v1390, %v1433
    %v1452 = vmul.f32 %v1392, %v1448
    %v1453 = vmul.f32 %v1394, %v1433
    %v1454 = vmul.f32 %v1396, %v1448
    %v1455 = vmul.f32 %v1398, %v1433
    %v1456 = vmul.f32 %v1400, %v1448
    %1457 = vmatpush.msra.mxu0 0.0
    %1458 = vmatpush.msra.mxu0 0.0
    %1459 = vmatpush.msra.mxu0 0.0
    %1460 = vmatpush.msra.mxu0 0.0
    %1461 = vmatpush.msra.mxu0 0.0
    %1462 = vmatpush.msra.mxu0 0.0
    %1463 = vmatpush.msra.mxu0 0.0
    %1464 = vmatpush.msra.mxu0 0.0
    %1465 = vmatpush.msra.mxu0 0.0
    %1466 = vmatpush.msra.mxu0 0.0
    %1467 = vmatpush.msra.mxu0 0.0
    %1468 = vmatpush.msra.mxu0 0.0
    %1469 = vmatpush.msra.mxu0 %v1197
    %1470 = vmatpush.msra.mxu0 %v1195
    %1471 = vmatpush.msra.mxu0 %v1193
    %1472 = vmatpush.msra.mxu0 %v1191
    %1473 = vmatmul.f32.gmra.mxu0 %v1218
    %v1474 = vpop.f32.mrf.mxu0
    %v1475 = vadd.f32 0.0, %v1474
    %1476 = vmatmul.f32.gmra.mxu0 %v1221
    %v1477 = vpop.f32.mrf.mxu0
    %v1478 = vadd.f32 0.0, %v1477
    %1479 = vmatmul.f32.gmra.mxu0 %v1224
    %v1480 = vpop.f32.mrf.mxu0
    %v1481 = vadd.f32 0.0, %v1480
    %1482 = vmatmul.f32.gmra.mxu0 %v1227
    %v1483 = vpop.f32.mrf.mxu0
    %v1484 = vadd.f32 0.0, %v1483
    %1485 = vmatmul.f32.gmra.mxu0 %v1230
    %v1486 = vpop.f32.mrf.mxu0
    %v1487 = vadd.f32 0.0, %v1486
    %1488 = vmatmul.f32.gmra.mxu0 %v1233
    %v1489 = vpop.f32.mrf.mxu0
    %v1490 = vadd.f32 0.0, %v1489
    %1491 = vmatmul.f32.gmra.mxu0 %v1236
    %v1492 = vpop.f32.mrf.mxu0
    %v1493 = vadd.f32 0.0, %v1492
    %1494 = vmatmul.f32.gmra.mxu0 %v1239
    %v1495 = vpop.f32.mrf.mxu0
    %v1496 = vadd.f32 0.0, %v1495
    %1497 = vmatmul.f32.gmra.mxu0 %v1242
    %v1498 = vpop.f32.mrf.mxu0
    %v1499 = vadd.f32 0.0, %v1498
    %1500 = vmatmul.f32.gmra.mxu0 %v1245
    %v1501 = vpop.f32.mrf.mxu0
    %v1502 = vadd.f32 0.0, %v1501
    %1503 = vmatmul.f32.gmra.mxu0 %v1248
    %v1504 = vpop.f32.mrf.mxu0
    %v1505 = vadd.f32 0.0, %v1504
    %1506 = vmatmul.f32.gmra.mxu0 %v1251
    %v1507 = vpop.f32.mrf.mxu0
    %v1508 = vadd.f32 0.0, %v1507
    %1509 = vdwg.mxu0
    %1510 = vmatpush.msra.mxu0 0.0
    %1511 = vmatpush.msra.mxu0 0.0
    %1512 = vmatpush.msra.mxu0 0.0
    %1513 = vmatpush.msra.mxu0 0.0
    %1514 = vmatpush.msra.mxu0 0.0
    %1515 = vmatpush.msra.mxu0 0.0
    %1516 = vmatpush.msra.mxu0 0.0
    %1517 = vmatpush.msra.mxu0 0.0
    %1518 = vmatpush.msra.mxu0 0.0
    %1519 = vmatpush.msra.mxu0 0.0
    %1520 = vmatpush.msra.mxu0 0.0
    %1521 = vmatpush.msra.mxu0 0.0
    %1522 = vmatpush.msra.mxu0 %v1198
    %1523 = vmatpush.msra.mxu0 %v1196
    %1524 = vmatpush.msra.mxu0 %v1194
    %1525 = vmatpush.msra.mxu0 %v1192
    %1526 = vmatmul.f32.gmra.mxu0 %v1218
    %v1527 = vpop.f32.mrf.mxu0
    %v1528 = vadd.f32 0.0, %v1527
    %1529 = vmatmul.f32.gmra.mxu0 %v1221
    %v1530 = vpop.f32.mrf.mxu0
    %v1531 = vadd.f32 0.0, %v1530
    %1532 = vmatmul.f32.gmra.mxu0 %v1224
    %v1533 = vpop.f32.mrf.mxu0
    %v1534 = vadd.f32 0.0, %v1533
    %1535 = vmatmul.f32.gmra.mxu0 %v1227
    %v1536 = vpop.f32.mrf.mxu0
    %v1537 = vadd.f32 0.0, %v1536
    %1538 = vmatmul.f32.gmra.mxu0 %v1230
    %v1539 = vpop.f32.mrf.mxu0
    %v1540 = vadd.f32 0.0, %v1539
    %1541 = vmatmul.f32.gmra.mxu0 %v1233
    %v1542 = vpop.f32.mrf.mxu0
    %v1543 = vadd.f32 0.0, %v1542
    %1544 = vmatmul.f32.gmra.mxu0 %v1236
    %v1545 = vpop.f32.mrf.mxu0
    %v1546 = vadd.f32 0.0, %v1545
    %1547 = vmatmul.f32.gmra.mxu0 %v1239
    %v1548 = vpop.f32.mrf.mxu0
    %v1549 = vadd.f32 0.0, %v1548
    %1550 = vmatmul.f32.gmra.mxu0 %v1242
    %v1551 = vpop.f32.mrf.mxu0
    %v1552 = vadd.f32 0.0, %v1551
    %1553 = vmatmul.f32.gmra.mxu0 %v1245
    %v1554 = vpop.f32.mrf.mxu0
    %v1555 = vadd.f32 0.0, %v1554
    %1556 = vmatmul.f32.gmra.mxu0 %v1248
    %v1557 = vpop.f32.mrf.mxu0
    %v1558 = vadd.f32 0.0, %v1557
    %1559 = vmatmul.f32.gmra.mxu0 %v1251
    %v1560 = vpop.f32.mrf.mxu0
    %v1561 = vadd.f32 0.0, %v1560
    %1562 = vdwg.mxu0
    %v1563 = vmax.f32 %v1475, %v1481
    %v1564 = vmax.f32 %v1478, %v1484
    %v1565 = vmax.f32 %v1563, %v1564
    %v1566 = vrot.slane %v1565, 4
    %v1567 = vmax.f32 %v1565, %v1566
    %v1568 = vrot.slane %v1567, 2
    %v1569 = vmax.f32 %v1567, %v1568
    %v1570 = vrot.slane %v1569, 1
    %v1571 = vmax.f32 %v1569, %v1570
    %v1572 = vmax.f32 %v1528, %v1534
    %v1573 = vmax.f32 %v1531, %v1537
    %v1574 = vmax.f32 %v1572, %v1573
    %v1575 = vrot.slane %v1574, 4
    %v1576 = vmax.f32 %v1574, %v1575
    %v1577 = vrot.slane %v1576, 2
    %v1578 = vmax.f32 %v1576, %v1577
    %v1579 = vrot.slane %v1578, 1
    %v1580 = vmax.f32 %v1578, %v1579
    %v1581 = vsub.f32 %v1475, %v1571
    %v1582 = vsub.f32 %v1528, %v1580
    %v1583 = vsub.f32 %v1478, %v1571
    %v1584 = vsub.f32 %v1531, %v1580
    %v1585 = vsub.f32 %v1481, %v1571
    %v1586 = vsub.f32 %v1534, %v1580
    %v1587 = vsub.f32 %v1484, %v1571
    %v1588 = vsub.f32 %v1537, %v1580
    %v1589 = vmul.f32 %v1581, 1.442695
    %v1590 = vpow.pop %v1589
    %v1591 = vmul.f32 %v1582, 1.442695
    %v1592 = vpow.pop %v1591
    %v1593 = vmul.f32 %v1583, 1.442695
    %v1594 = vpow.pop %v1593
    %v1595 = vmul.f32 %v1584, 1.442695
    %v1596 = vpow.pop %v1595
    %v1597 = vmul.f32 %v1585, 1.442695
    %v1598 = vpow.pop %v1597
    %v1599 = vmul.f32 %v1586, 1.442695
    %v1600 = vpow.pop %v1599
    %v1601 = vmul.f32 %v1587, 1.442695
    %v1602 = vpow.pop %v1601
    %v1603 = vmul.f32 %v1588, 1.442695
    %v1604 = vpow.pop %v1603
    %v1605 = vadd.f32 %v1590, %v1594
    %v1606 = vadd.f32 %v1605, %v1598
    %v1607 = vadd.f32 %v1606, %v1602
    %v1608 = vrot.slane %v1607, 4
    %v1609 = vadd.f32 %v1607, %v1608
    %v1610 = vrot.slane %v1609, 2
    %v1611 = vadd.f32 %v1609, %v1610
    %v1612 = vrot.slane %v1611, 1
    %v1613 = vadd.f32 %v1611, %v1612
    %v1614 = vadd.f32 %v1592, %v1596
    %v1615 = vadd.f32 %v1614, %v1600
    %v1616 = vadd.f32 %v1615, %v1604
    %v1617 = vrot.slane %v1616, 4
    %v1618 = vadd.f32 %v1616, %v1617
    %v1619 = vrot.slane %v1618, 2
    %v1620 = vadd.f32 %v1618, %v1619
    %v1621 = vrot.slane %v1620, 1
    %v1622 = vadd.f32 %v1620, %v1621
    %v1623 = vrcp.pop %v1613
    %v1624 = vmul.f32 %v1613, %v1623
    %v1625 = vsub.f32 1.0, %v1624
    %v1626 = vmul.f32 %v1623, %v1625
    %v1627 = vadd.f32 %v1623, %v1626
    %vm1628 = vweird.f32 %v1613
    %vm1629 = vweird.f32 %v1623
    %vm1630 = vmor %vm1628, %vm1629
    %v1631 = vsel %vm1630, %v1623, %v1627
    %v1632 = vand.u32 2147483647, %v1613
    %vm1633 = vcmp.eq.f32.partialorder %v1632, 8.507059e+37
    %v1634 = vand.u32 %v1613, 2147483648
    %v1635 = vor.u32 1.1754944e-38, %v1634
    %v1636 = vsel %vm1633, %v1635, %v1631
    %v1637 = vmul.f32 0.17677669, %v1636
    %v1638 = vrcp.pop %v1622
    %v1639 = vmul.f32 %v1622, %v1638
    %v1640 = vsub.f32 1.0, %v1639
    %v1641 = vmul.f32 %v1638, %v1640
    %v1642 = vadd.f32 %v1638, %v1641
    %vm1643 = vweird.f32 %v1622
    %vm1644 = vweird.f32 %v1638
    %vm1645 = vmor %vm1643, %vm1644
    %v1646 = vsel %vm1645, %v1638, %v1642
    %v1647 = vand.u32 2147483647, %v1622
    %vm1648 = vcmp.eq.f32.partialorder %v1647, 8.507059e+37
    %v1649 = vand.u32 %v1622, 2147483648
    %v1650 = vor.u32 1.1754944e-38, %v1649
    %v1651 = vsel %vm1648, %v1650, %v1646
    %v1652 = vmul.f32 0.17677669, %v1651
    %v1653 = vmul.f32 %v1590, %v1637
    %v1654 = vmul.f32 %v1592, %v1652
    %v1655 = vmul.f32 %v1594, %v1637
    %v1656 = vmul.f32 %v1596, %v1652
    %v1657 = vmul.f32 %v1598, %v1637
    %v1658 = vmul.f32 %v1600, %v1652
    %v1659 = vmul.f32 %v1602, %v1637
    %v1660 = vmul.f32 %v1604, %v1652
    %v1661 = vmax.f32 %v1283, %v1487
    %v1662 = vmax.f32 %v1336, %v1540
    %v1663 = vmax.f32 %v1286, %v1490
    %v1664 = vmax.f32 %v1339, %v1543
    %v1665 = vmax.f32 %v1289, %v1493
    %v1666 = vmax.f32 %v1342, %v1546
    %v1667 = vmax.f32 %v1292, %v1496
    %v1668 = vmax.f32 %v1345, %v1549
    %v1669 = vsub.f32 %v1283, %v1661
    %v1670 = vsub.f32 %v1336, %v1662
    %v1671 = vsub.f32 %v1286, %v1663
    %v1672 = vsub.f32 %v1339, %v1664
    %v1673 = vsub.f32 %v1289, %v1665
    %v1674 = vsub.f32 %v1342, %v1666
    %v1675 = vsub.f32 %v1292, %v1667
    %v1676 = vsub.f32 %v1345, %v1668
    %v1677 = vmul.f32 %v1669, 1.442695
    %v1678 = vpow.pop %v1677
    %v1679 = vmul.f32 %v1670, 1.442695
    %v1680 = vpow.pop %v1679
    %v1681 = vmul.f32 %v1671, 1.442695
    %v1682 = vpow.pop %v1681
    %v1683 = vmul.f32 %v1672, 1.442695
    %v1684 = vpow.pop %v1683
    %v1685 = vmul.f32 %v1673, 1.442695
    %v1686 = vpow.pop %v1685
    %v1687 = vmul.f32 %v1674, 1.442695
    %v1688 = vpow.pop %v1687
    %v1689 = vmul.f32 %v1675, 1.442695
    %v1690 = vpow.pop %v1689
    %v1691 = vmul.f32 %v1676, 1.442695
    %v1692 = vpow.pop %v1691
    %v1693 = vsub.f32 %v1487, %v1661
    %v1694 = vsub.f32 %v1540, %v1662
    %v1695 = vsub.f32 %v1490, %v1663
    %v1696 = vsub.f32 %v1543, %v1664
    %v1697 = vsub.f32 %v1493, %v1665
    %v1698 = vsub.f32 %v1546, %v1666
    %v1699 = vsub.f32 %v1496, %v1667
    %v1700 = vsub.f32 %v1549, %v1668
    %v1701 = vmul.f32 %v1693, 1.442695
    %v1702 = vpow.pop %v1701
    %v1703 = vmul.f32 %v1694, 1.442695
    %v1704 = vpow.pop %v1703
    %v1705 = vmul.f32 %v1695, 1.442695
    %v1706 = vpow.pop %v1705
    %v1707 = vmul.f32 %v1696, 1.442695
    %v1708 = vpow.pop %v1707
    %v1709 = vmul.f32 %v1697, 1.442695
    %v1710 = vpow.pop %v1709
    %v1711 = vmul.f32 %v1698, 1.442695
    %v1712 = vpow.pop %v1711
    %v1713 = vmul.f32 %v1699, 1.442695
    %v1714 = vpow.pop %v1713
    %v1715 = vmul.f32 %v1700, 1.442695
    %v1716 = vpow.pop %v1715
    %v1717 = vadd.f32 %v1678, %v1702
    %v1718 = vadd.f32 %v1680, %v1704
    %v1719 = vadd.f32 %v1682, %v1706
    %v1720 = vadd.f32 %v1684, %v1708
    %v1721 = vadd.f32 %v1686, %v1710
    %v1722 = vadd.f32 %v1688, %v1712
    %v1723 = vadd.f32 %v1690, %v1714
    %v1724 = vadd.f32 %v1692, %v1716
    %v1725 = vrcp.pop %v1717
    %v1726 = vmul.f32 %v1717, %v1725
    %v1727 = vsub.f32 1.0, %v1726
    %v1728 = vmul.f32 %v1725, %v1727
    %v1729 = vadd.f32 %v1725, %v1728
    %vm1730 = vweird.f32 %v1717
    %vm1731 = vweird.f32 %v1725
    %vm1732 = vmor %vm1730, %vm1731
    %v1733 = vsel %vm1732, %v1725, %v1729
    %v1734 = vand.u32 2147483647, %v1717
    %vm1735 = vcmp.eq.f32.partialorder %v1734, 8.507059e+37
    %v1736 = vand.u32 %v1717, 2147483648
    %v1737 = vor.u32 1.1754944e-38, %v1736
    %v1738 = vsel %vm1735, %v1737, %v1733
    %v1739 = vmul.f32 1.0, %v1738
    %v1740 = vrcp.pop %v1718
    %v1741 = vmul.f32 %v1718, %v1740
    %v1742 = vsub.f32 1.0, %v1741
    %v1743 = vmul.f32 %v1740, %v1742
    %v1744 = vadd.f32 %v1740, %v1743
    %vm1745 = vweird.f32 %v1718
    %vm1746 = vweird.f32 %v1740
    %vm1747 = vmor %vm1745, %vm1746
    %v1748 = vsel %vm1747, %v1740, %v1744
    %v1749 = vand.u32 2147483647, %v1718
    %vm1750 = vcmp.eq.f32.partialorder %v1749, 8.507059e+37
    %v1751 = vand.u32 %v1718, 2147483648
    %v1752 = vor.u32 1.1754944e-38, %v1751
    %v1753 = vsel %vm1750, %v1752, %v1748
    %v1754 = vmul.f32 1.0, %v1753
    %v1755 = vrcp.pop %v1719
    %v1756 = vmul.f32 %v1719, %v1755
    %v1757 = vsub.f32 1.0, %v1756
    %v1758 = vmul.f32 %v1755, %v1757
    %v1759 = vadd.f32 %v1755, %v1758
    %vm1760 = vweird.f32 %v1719
    %vm1761 = vweird.f32 %v1755
    %vm1762 = vmor %vm1760, %vm1761
    %v1763 = vsel %vm1762, %v1755, %v1759
    %v1764 = vand.u32 2147483647, %v1719
    %vm1765 = vcmp.eq.f32.partialorder %v1764, 8.507059e+37
    %v1766 = vand.u32 %v1719, 2147483648
    %v1767 = vor.u32 1.1754944e-38, %v1766
    %v1768 = vsel %vm1765, %v1767, %v1763
    %v1769 = vmul.f32 1.0, %v1768
    %v1770 = vrcp.pop %v1720
    %v1771 = vmul.f32 %v1720, %v1770
    %v1772 = vsub.f32 1.0, %v1771
    %v1773 = vmul.f32 %v1770, %v1772
    %v1774 = vadd.f32 %v1770, %v1773
    %vm1775 = vweird.f32 %v1720
    %vm1776 = vweird.f32 %v1770
    %vm1777 = vmor %vm1775, %vm1776
    %v1778 = vsel %vm1777, %v1770, %v1774
    %v1779 = vand.u32 2147483647, %v1720
    %vm1780 = vcmp.eq.f32.partialorder %v1779, 8.507059e+37
    %v1781 = vand.u32 %v1720, 2147483648
    %v1782 = vor.u32 1.1754944e-38, %v1781
    %v1783 = vsel %vm1780, %v1782, %v1778
    %v1784 = vmul.f32 1.0, %v1783
    %v1785 = vrcp.pop %v1721
    %v1786 = vmul.f32 %v1721, %v1785
    %v1787 = vsub.f32 1.0, %v1786
    %v1788 = vmul.f32 %v1785, %v1787
    %v1789 = vadd.f32 %v1785, %v1788
    %vm1790 = vweird.f32 %v1721
    %vm1791 = vweird.f32 %v1785
    %vm1792 = vmor %vm1790, %vm1791
    %v1793 = vsel %vm1792, %v1785, %v1789
    %v1794 = vand.u32 2147483647, %v1721
    %vm1795 = vcmp.eq.f32.partialorder %v1794, 8.507059e+37
    %v1796 = vand.u32 %v1721, 2147483648
    %v1797 = vor.u32 1.1754944e-38, %v1796
    %v1798 = vsel %vm1795, %v1797, %v1793
    %v1799 = vmul.f32 1.0, %v1798
    %v1800 = vrcp.pop %v1722
    %v1801 = vmul.f32 %v1722, %v1800
    %v1802 = vsub.f32 1.0, %v1801
    %v1803 = vmul.f32 %v1800, %v1802
    %v1804 = vadd.f32 %v1800, %v1803
    %vm1805 = vweird.f32 %v1722
    %vm1806 = vweird.f32 %v1800
    %vm1807 = vmor %vm1805, %vm1806
    %v1808 = vsel %vm1807, %v1800, %v1804
    %v1809 = vand.u32 2147483647, %v1722
    %vm1810 = vcmp.eq.f32.partialorder %v1809, 8.507059e+37
    %v1811 = vand.u32 %v1722, 2147483648
    %v1812 = vor.u32 1.1754944e-38, %v1811
    %v1813 = vsel %vm1810, %v1812, %v1808
    %v1814 = vmul.f32 1.0, %v1813
    %v1815 = vrcp.pop %v1723
    %v1816 = vmul.f32 %v1723, %v1815
    %v1817 = vsub.f32 1.0, %v1816
    %v1818 = vmul.f32 %v1815, %v1817
    %v1819 = vadd.f32 %v1815, %v1818
    %vm1820 = vweird.f32 %v1723
    %vm1821 = vweird.f32 %v1815
    %vm1822 = vmor %vm1820, %vm1821
    %v1823 = vsel %vm1822, %v1815, %v1819
    %v1824 = vand.u32 2147483647, %v1723
    %vm1825 = vcmp.eq.f32.partialorder %v1824, 8.507059e+37
    %v1826 = vand.u32 %v1723, 2147483648
    %v1827 = vor.u32 1.1754944e-38, %v1826
    %v1828 = vsel %vm1825, %v1827, %v1823
    %v1829 = vmul.f32 1.0, %v1828
    %v1830 = vrcp.pop %v1724
    %v1831 = vmul.f32 %v1724, %v1830
    %v1832 = vsub.f32 1.0, %v1831
    %v1833 = vmul.f32 %v1830, %v1832
    %v1834 = vadd.f32 %v1830, %v1833
    %vm1835 = vweird.f32 %v1724
    %vm1836 = vweird.f32 %v1830
    %vm1837 = vmor %vm1835, %vm1836
    %v1838 = vsel %vm1837, %v1830, %v1834
    %v1839 = vand.u32 2147483647, %v1724
    %vm1840 = vcmp.eq.f32.partialorder %v1839, 8.507059e+37
    %v1841 = vand.u32 %v1724, 2147483648
    %v1842 = vor.u32 1.1754944e-38, %v1841
    %v1843 = vsel %vm1840, %v1842, %v1838
    %v1844 = vmul.f32 1.0, %v1843
    %v1845 = vmul.f32 %v1678, %v1739
    %v1846 = vmul.f32 %v1680, %v1754
    %v1847 = vmul.f32 %v1682, %v1769
    %v1848 = vmul.f32 %v1684, %v1784
    %v1849 = vmul.f32 %v1686, %v1799
    %v1850 = vmul.f32 %v1688, %v1814
    %v1851 = vmul.f32 %v1690, %v1829
    %v1852 = vmul.f32 %v1692, %v1844
    %v1853 = vmul.f32 %v1702, %v1739
    %v1854 = vmul.f32 %v1704, %v1754
    %v1855 = vmul.f32 %v1706, %v1769
    %v1856 = vmul.f32 %v1708, %v1784
    %v1857 = vmul.f32 %v1710, %v1799
    %v1858 = vmul.f32 %v1712, %v1814
    %v1859 = vmul.f32 %v1714, %v1829
    %v1860 = vmul.f32 %v1716, %v1844
    %v1861 = vmul.f32 %v1449, %v1845
    %v1862 = vmul.f32 %v1450, %v1846
    %v1863 = vmul.f32 %v1451, %v1847
    %v1864 = vmul.f32 %v1452, %v1848
    %v1865 = vmul.f32 %v1453, %v1849
    %v1866 = vmul.f32 %v1454, %v1850
    %v1867 = vmul.f32 %v1455, %v1851
    %v1868 = vmul.f32 %v1456, %v1852
    %v1869 = vadd.f32 %v1861, %v1863
    %v1870 = vadd.f32 %v1869, %v1865
    %v1871 = vadd.f32 %v1870, %v1867
    %v1872 = vrot.slane %v1871, 4
    %v1873 = vadd.f32 %v1871, %v1872
    %v1874 = vrot.slane %v1873, 2
    %v1875 = vadd.f32 %v1873, %v1874
    %v1876 = vrot.slane %v1875, 1
    %v1877 = vadd.f32 %v1875, %v1876
    %v1878 = vadd.f32 %v1862, %v1864
    %v1879 = vadd.f32 %v1878, %v1866
    %v1880 = vadd.f32 %v1879, %v1868
    %v1881 = vrot.slane %v1880, 4
    %v1882 = vadd.f32 %v1880, %v1881
    %v1883 = vrot.slane %v1882, 2
    %v1884 = vadd.f32 %v1882, %v1883
    %v1885 = vrot.slane %v1884, 1
    %v1886 = vadd.f32 %v1884, %v1885
    %v1887 = vmul.f32 %v1877, %v1295
    %v1888 = vmul.f32 %v1886, %v1348
    %v1889 = vmul.f32 %v1877, %v1298
    %v1890 = vmul.f32 %v1886, %v1351
    %v1891 = vmul.f32 %v1877, %v1301
    %v1892 = vmul.f32 %v1886, %v1354
    %v1893 = vmul.f32 %v1877, %v1304
    %v1894 = vmul.f32 %v1886, %v1357
    %v1895 = vmul.f32 %v1449, %v1853
    %v1896 = vmul.f32 %v1450, %v1854
    %v1897 = vmul.f32 %v1451, %v1855
    %v1898 = vmul.f32 %v1452, %v1856
    %v1899 = vmul.f32 %v1453, %v1857
    %v1900 = vmul.f32 %v1454, %v1858
    %v1901 = vmul.f32 %v1455, %v1859
    %v1902 = vmul.f32 %v1456, %v1860
    %v1903 = vadd.f32 %v1895, %v1897
    %v1904 = vadd.f32 %v1903, %v1899
    %v1905 = vadd.f32 %v1904, %v1901
    %v1906 = vrot.slane %v1905, 4
    %v1907 = vadd.f32 %v1905, %v1906
    %v1908 = vrot.slane %v1907, 2
    %v1909 = vadd.f32 %v1907, %v1908
    %v1910 = vrot.slane %v1909, 1
    %v1911 = vadd.f32 %v1909, %v1910
    %v1912 = vadd.f32 %v1896, %v1898
    %v1913 = vadd.f32 %v1912, %v1900
    %v1914 = vadd.f32 %v1913, %v1902
    %v1915 = vrot.slane %v1914, 4
    %v1916 = vadd.f32 %v1914, %v1915
    %v1917 = vrot.slane %v1916, 2
    %v1918 = vadd.f32 %v1916, %v1917
    %v1919 = vrot.slane %v1918, 1
    %v1920 = vadd.f32 %v1918, %v1919
    %v1921 = vmul.f32 %v1911, %v1499
    %v1922 = vmul.f32 %v1920, %v1552
    %v1923 = vmul.f32 %v1911, %v1502
    %v1924 = vmul.f32 %v1920, %v1555
    %v1925 = vmul.f32 %v1911, %v1505
    %v1926 = vmul.f32 %v1920, %v1558
    %v1927 = vmul.f32 %v1911, %v1508
    %v1928 = vmul.f32 %v1920, %v1561
    %v1929 = vadd.f32 %v1887, %v1921
    %v1930 = vadd.f32 %v1888, %v1922
    %v1931 = vadd.f32 %v1889, %v1923
    %v1932 = vadd.f32 %v1890, %v1924
    %v1933 = vadd.f32 %v1891, %v1925
    %v1934 = vadd.f32 %v1892, %v1926
    %v1935 = vadd.f32 %v1893, %v1927
    %v1936 = vadd.f32 %v1894, %v1928
    %v1937 = vadd.f32 %v1041, %v1929
    %v1938 = vadd.f32 %v1042, %v1930
    %v1939 = vadd.f32 %v1043, %v1931
    %v1940 = vadd.f32 %v1044, %v1932
    %v1941 = vadd.f32 %v1045, %v1933
    %v1942 = vadd.f32 %v1046, %v1934
    %v1943 = vadd.f32 %v1047, %v1935
    %v1944 = vadd.f32 %v1048, %v1936
    %v1946 = vsel %vm65, %v1213, 0
    %v1949 = vsel %vm65, %v1214, 0
    %v1952 = vsel %vm65, %v1215, 0
    %v1955 = vsel %vm65, %v1216, 0
    %1957 = vmatpush.msra.mxu0 0.0
    %1958 = vmatpush.msra.mxu0 0.0
    %1959 = vmatpush.msra.mxu0 0.0
    %1960 = vmatpush.msra.mxu0 0.0
    %1961 = vmatpush.msra.mxu0 0.0
    %1962 = vmatpush.msra.mxu0 0.0
    %1963 = vmatpush.msra.mxu0 0.0
    %1964 = vmatpush.msra.mxu0 0.0
    %1965 = vmatpush.msra.mxu0 0.0
    %1966 = vmatpush.msra.mxu0 0.0
    %1967 = vmatpush.msra.mxu0 0.0
    %1968 = vmatpush.msra.mxu0 0.0
    %1969 = vmatpush.msra.mxu0 %v1943
    %1970 = vmatpush.msra.mxu0 %v1941
    %1971 = vmatpush.msra.mxu0 %v1939
    %1972 = vmatpush.msra.mxu0 %v1937
    %1973 = vmatmul.f32.gmra.mxu0 %v1946
    %v1974 = vpop.f32.mrf.mxu0
    %v1975 = vadd.f32 0.0, %v1974
    %1976 = vmatmul.f32.gmra.mxu0 %v1949
    %v1977 = vpop.f32.mrf.mxu0
    %v1978 = vadd.f32 0.0, %v1977
    %1979 = vmatmul.f32.gmra.mxu0 %v1952
    %v1980 = vpop.f32.mrf.mxu0
    %v1981 = vadd.f32 0.0, %v1980
    %1982 = vmatmul.f32.gmra.mxu0 %v1955
    %v1983 = vpop.f32.mrf.mxu0
    %v1984 = vadd.f32 0.0, %v1983
    %1985 = vdwg.mxu0
    %1986 = vmatpush.msra.mxu0 0.0
    %1987 = vmatpush.msra.mxu0 0.0
    %1988 = vmatpush.msra.mxu0 0.0
    %1989 = vmatpush.msra.mxu0 0.0
    %1990 = vmatpush.msra.mxu0 0.0
    %1991 = vmatpush.msra.mxu0 0.0
    %1992 = vmatpush.msra.mxu0 0.0
    %1993 = vmatpush.msra.mxu0 0.0
    %1994 = vmatpush.msra.mxu0 0.0
    %1995 = vmatpush.msra.mxu0 0.0
    %1996 = vmatpush.msra.mxu0 0.0
    %1997 = vmatpush.msra.mxu0 0.0
    %1998 = vmatpush.msra.mxu0 %v1944
    %1999 = vmatpush.msra.mxu0 %v1942
    %2000 = vmatpush.msra.mxu0 %v1940
    %2001 = vmatpush.msra.mxu0 %v1938
    %2002 = vmatmul.f32.gmra.mxu0 %v1946
    %v2003 = vpop.f32.mrf.mxu0
    %v2004 = vadd.f32 0.0, %v2003
    %2005 = vmatmul.f32.gmra.mxu0 %v1949
    %v2006 = vpop.f32.mrf.mxu0
    %v2007 = vadd.f32 0.0, %v2006
    %2008 = vmatmul.f32.gmra.mxu0 %v1952
    %v2009 = vpop.f32.mrf.mxu0
    %v2010 = vadd.f32 0.0, %v2009
    %2011 = vmatmul.f32.gmra.mxu0 %v1955
    %v2012 = vpop.f32.mrf.mxu0
    %v2013 = vadd.f32 0.0, %v2012
    %2014 = vdwg.mxu0
    %v2015 = vadd.f32 %v1937, %v1975
    %v2016 = vadd.f32 %v1938, %v2004
    %v2017 = vadd.f32 %v1939, %v1978
    %v2018 = vadd.f32 %v1940, %v2007
    %v2019 = vadd.f32 %v1941, %v1981
    %v2020 = vadd.f32 %v1942, %v2010
    %v2021 = vadd.f32 %v1943, %v1984
    %v2022 = vadd.f32 %v1944, %v2013
    %v2023 = vmul.f32 %v1653, %v1845
    %v2024 = vmul.f32 %v1654, %v1846
    %v2025 = vmul.f32 %v1655, %v1847
    %v2026 = vmul.f32 %v1656, %v1848
    %v2027 = vmul.f32 %v1657, %v1849
    %v2028 = vmul.f32 %v1658, %v1850
    %v2029 = vmul.f32 %v1659, %v1851
    %v2030 = vmul.f32 %v1660, %v1852
    %v2031 = vadd.f32 %v2023, %v2025
    %v2032 = vadd.f32 %v2031, %v2027
    %v2033 = vadd.f32 %v2032, %v2029
    %v2034 = vrot.slane %v2033, 4
    %v2035 = vadd.f32 %v2033, %v2034
    %v2036 = vrot.slane %v2035, 2
    %v2037 = vadd.f32 %v2035, %v2036
    %v2038 = vrot.slane %v2037, 1
    %v2039 = vadd.f32 %v2037, %v2038
    %v2040 = vadd.f32 %v2024, %v2026
    %v2041 = vadd.f32 %v2040, %v2028
    %v2042 = vadd.f32 %v2041, %v2030
    %v2043 = vrot.slane %v2042, 4
    %v2044 = vadd.f32 %v2042, %v2043
    %v2045 = vrot.slane %v2044, 2
    %v2046 = vadd.f32 %v2044, %v2045
    %v2047 = vrot.slane %v2046, 1
    %v2048 = vadd.f32 %v2046, %v2047
    %v2049 = vmul.f32 %v2039, %v1295
    %v2050 = vmul.f32 %v2048, %v1348
    %v2051 = vmul.f32 %v2039, %v1298
    %v2052 = vmul.f32 %v2048, %v1351
    %v2053 = vmul.f32 %v2039, %v1301
    %v2054 = vmul.f32 %v2048, %v1354
    %v2055 = vmul.f32 %v2039, %v1304
    %v2056 = vmul.f32 %v2048, %v1357
    %v2057 = vmul.f32 %v1653, %v1853
    %v2058 = vmul.f32 %v1654, %v1854
    %v2059 = vmul.f32 %v1655, %v1855
    %v2060 = vmul.f32 %v1656, %v1856
    %v2061 = vmul.f32 %v1657, %v1857
    %v2062 = vmul.f32 %v1658, %v1858
    %v2063 = vmul.f32 %v1659, %v1859
    %v2064 = vmul.f32 %v1660, %v1860
    %v2065 = vadd.f32 %v2057, %v2059
    %v2066 = vadd.f32 %v2065, %v2061
    %v2067 = vadd.f32 %v2066, %v2063
    %v2068 = vrot.slane %v2067, 4
    %v2069 = vadd.f32 %v2067, %v2068
    %v2070 = vrot.slane %v2069, 2
    %v2071 = vadd.f32 %v2069, %v2070
    %v2072 = vrot.slane %v2071, 1
    %v2073 = vadd.f32 %v2071, %v2072
    %v2074 = vadd.f32 %v2058, %v2060
    %v2075 = vadd.f32 %v2074, %v2062
    %v2076 = vadd.f32 %v2075, %v2064
    %v2077 = vrot.slane %v2076, 4
    %v2078 = vadd.f32 %v2076, %v2077
    %v2079 = vrot.slane %v2078, 2
    %v2080 = vadd.f32 %v2078, %v2079
    %v2081 = vrot.slane %v2080, 1
    %v2082 = vadd.f32 %v2080, %v2081
    %v2083 = vmul.f32 %v2073, %v1499
    %v2084 = vmul.f32 %v2082, %v1552
    %v2085 = vmul.f32 %v2073, %v1502
    %v2086 = vmul.f32 %v2082, %v1555
    %v2087 = vmul.f32 %v2073, %v1505
    %v2088 = vmul.f32 %v2082, %v1558
    %v2089 = vmul.f32 %v2073, %v1508
    %v2090 = vmul.f32 %v2082, %v1561
    %v2091 = vadd.f32 %v2049, %v2083
    %v2092 = vadd.f32 %v2050, %v2084
    %v2093 = vadd.f32 %v2051, %v2085
    %v2094 = vadd.f32 %v2052, %v2086
    %v2095 = vadd.f32 %v2053, %v2087
    %v2096 = vadd.f32 %v2054, %v2088
    %v2097 = vadd.f32 %v2055, %v2089
    %v2098 = vadd.f32 %v2056, %v2090
    %v2099 = vadd.f32 %v1191, %v2091
    %v2100 = vadd.f32 %v1192, %v2092
    %v2101 = vadd.f32 %v1193, %v2093
    %v2102 = vadd.f32 %v1194, %v2094
    %v2103 = vadd.f32 %v1195, %v2095
    %v2104 = vadd.f32 %v1196, %v2096
    %v2105 = vadd.f32 %v1197, %v2097
    %v2106 = vadd.f32 %v1198, %v2098
    %2107 = vmatpush.msra.mxu0 0.0
    %2108 = vmatpush.msra.mxu0 0.0
    %2109 = vmatpush.msra.mxu0 0.0
    %2110 = vmatpush.msra.mxu0 0.0
    %2111 = vmatpush.msra.mxu0 0.0
    %2112 = vmatpush.msra.mxu0 0.0
    %2113 = vmatpush.msra.mxu0 0.0
    %2114 = vmatpush.msra.mxu0 0.0
    %2115 = vmatpush.msra.mxu0 0.0
    %2116 = vmatpush.msra.mxu0 0.0
    %2117 = vmatpush.msra.mxu0 0.0
    %2118 = vmatpush.msra.mxu0 0.0
    %2119 = vmatpush.msra.mxu0 %v2105
    %2120 = vmatpush.msra.mxu0 %v2103
    %2121 = vmatpush.msra.mxu0 %v2101
    %2122 = vmatpush.msra.mxu0 %v2099
    %2123 = vmatmul.f32.gmra.mxu0 %v1946
    %v2124 = vpop.f32.mrf.mxu0
    %v2125 = vadd.f32 0.0, %v2124
    %2126 = vmatmul.f32.gmra.mxu0 %v1949
    %v2127 = vpop.f32.mrf.mxu0
    %v2128 = vadd.f32 0.0, %v2127
    %2129 = vmatmul.f32.gmra.mxu0 %v1952
    %v2130 = vpop.f32.mrf.mxu0
    %v2131 = vadd.f32 0.0, %v2130
    %2132 = vmatmul.f32.gmra.mxu0 %v1955
    %v2133 = vpop.f32.mrf.mxu0
    %v2134 = vadd.f32 0.0, %v2133
    %2135 = vdwg.mxu0
    %2136 = vmatpush.msra.mxu0 0.0
    %2137 = vmatpush.msra.mxu0 0.0
    %2138 = vmatpush.msra.mxu0 0.0
    %2139 = vmatpush.msra.mxu0 0.0
    %2140 = vmatpush.msra.mxu0 0.0
    %2141 = vmatpush.msra.mxu0 0.0
    %2142 = vmatpush.msra.mxu0 0.0
    %2143 = vmatpush.msra.mxu0 0.0
    %2144 = vmatpush.msra.mxu0 0.0
    %2145 = vmatpush.msra.mxu0 0.0
    %2146 = vmatpush.msra.mxu0 0.0
    %2147 = vmatpush.msra.mxu0 0.0
    %2148 = vmatpush.msra.mxu0 %v2106
    %2149 = vmatpush.msra.mxu0 %v2104
    %2150 = vmatpush.msra.mxu0 %v2102
    %2151 = vmatpush.msra.mxu0 %v2100
    %2152 = vmatmul.f32.gmra.mxu0 %v1946
    %v2153 = vpop.f32.mrf.mxu0
    %v2154 = vadd.f32 0.0, %v2153
    %2155 = vmatmul.f32.gmra.mxu0 %v1949
    %v2156 = vpop.f32.mrf.mxu0
    %v2157 = vadd.f32 0.0, %v2156
    %2158 = vmatmul.f32.gmra.mxu0 %v1952
    %v2159 = vpop.f32.mrf.mxu0
    %v2160 = vadd.f32 0.0, %v2159
    %2161 = vmatmul.f32.gmra.mxu0 %v1955
    %v2162 = vpop.f32.mrf.mxu0
    %v2163 = vadd.f32 0.0, %v2162
    %2164 = vdwg.mxu0
    %v2165 = vadd.f32 %v2099, %v2125
    %v2166 = vadd.f32 %v2100, %v2154
    %v2167 = vadd.f32 %v2101, %v2128
    %v2168 = vadd.f32 %v2102, %v2157
    %v2169 = vadd.f32 %v2103, %v2131
    %v2170 = vadd.f32 %v2104, %v2160
    %v2171 = vadd.f32 %v2105, %v2134
    %v2172 = vadd.f32 %v2106, %v2163
    %2173 = vst [vmem:[#allocation2] sm:$0xff] %v2015
    %2174 = vst [vmem:[#allocation2 + $0x8] sm:$0xff] %v2016
    %2175 = vst [vmem:[#allocation2 + $0x10] sm:$0xff] %v2017
    %2176 = vst [vmem:[#allocation2 + $0x18] sm:$0xff] %v2018
    %2177 = vst [vmem:[#allocation2 + $0x20] sm:$0xff] %v2019
    %2178 = vst [vmem:[#allocation2 + $0x28] sm:$0xff] %v2020
    %2179 = vst [vmem:[#allocation2 + $0x30] sm:$0xff] %v2021
    %2180 = vst [vmem:[#allocation2 + $0x38] sm:$0xff] %v2022
    %s2181 = scalar_lea.vmem [#allocation2], 64
    %2182 = vst [vmem:[%s2181] sm:$0xff] %v2165
    %2183 = vst [vmem:[%s2181 + $0x8] sm:$0xff] %v2166
    %2184 = vst [vmem:[%s2181 + $0x10] sm:$0xff] %v2167
    %2185 = vst [vmem:[%s2181 + $0x18] sm:$0xff] %v2168
    %2186 = vst [vmem:[%s2181 + $0x20] sm:$0xff] %v2169
    %2187 = vst [vmem:[%s2181 + $0x28] sm:$0xff] %v2170
    %2188 = vst [vmem:[%s2181 + $0x30] sm:$0xff] %v2171
    %2189 = vst [vmem:[%s2181 + $0x38] sm:$0xff] %v2172
    // Predicated region
    $region22: #{tpu_custom_call.1} parent=1 // pred_check
      _
    $region23: #{tpu_custom_call.1} parent=1 // pred_check_branch
      %2191 = sbr.rel (0) target = $region25
    $region24: #{tpu_custom_call.1} parent=1 // pred_region
      %2193 = vsyncadd [#allocation3], 0
      %s2194 = sshll.u32 [#allocation2], 4
      %s2195 = int_to_ptr.vmem [resolvable:$true] %s2194
      %s2196 = sshll.u32 %s5, 4
      %s2197 = int_to_ptr.hbm [resolvable:$true] %s2196
      %2202 = dma.vmem_to_hbm [thread:$0]  %s2195, 2048, %s2197, [#allocation3], 256, 256, 16
    $region25: #{tpu_custom_call.1} parent=1 // pred_fallthru
      _
    // Predicated region
    $region26: #{tpu_custom_call.1} parent=1 // pred_check
      _
    $region27: #{tpu_custom_call.1} parent=1 // pred_check_branch
      %2204 = sbr.rel (0) target = $region29
    $region28: #{tpu_custom_call.1} parent=1 // pred_region
      %2206 = dma.done [#allocation3], 2048
    $region29: #{tpu_custom_call.1} parent=1 // pred_fallthru
      _
    %2207 = vsyncpa [#allocation3], 1

</llo_original>
